<compile_context>
chip_gen: v7x
topology: tpu7x:2x2x1
jax: 0.10.0
libtpu: 0.0.40
codegen_flags: <defaults>
</compile_context>

<pallas_src>
import functools

import jax
import jax.numpy as jnp
from jax.experimental import pallas as pl
from jax.experimental.pallas import tpu as pltpu

LAYER_SIZE = 128
BN_EPS = 1e-5
CIN_PAD = 8        # conv1 contraction dim padded to one f32 sublane tile
COUT_PAD = 8       # conv3 output rows padded to a full sublane group
NUM_SLICES = 2     # per-slice partial stats accumulators (v7x megacore)
_VMEM_LIMIT = 32 * 1024 * 1024


def _round_up(v, m):
    return ((v + m - 1) // m) * m


# ---------------------------------------------------------------------------
# kernels
# ---------------------------------------------------------------------------
def _stats_kernel(x_ref, w1f_ref, b1f_ref, w2_ref, sum_ref, sq_ref, *,
                  n_valid, tile_p, tiles_per_slice, needs_mask):
    """Accumulate per-channel sum / sumsq of the raw conv2 matmul output."""
    c = pl.program_id(0)
    i = pl.program_id(1)

    @pl.when(i == 0)
    def _():
        sum_ref[...] = jnp.zeros_like(sum_ref)
        sq_ref[...] = jnp.zeros_like(sq_ref)

    # conv1 (K = CIN_PAD, f32 MXU) with bn1 folded into the weights, + relu
    h1 = jnp.dot(w1f_ref[...], x_ref[...], preferred_element_type=jnp.float32)
    h1 = jnp.maximum(h1 + b1f_ref[...], 0.0)
    # conv2 raw matmul output (bias re-added to the statistics in the wrapper)
    d = jnp.dot(w2_ref[...], h1.astype(jnp.bfloat16),
                preferred_element_type=jnp.float32)
    if needs_mask:  # static: only emitted when zero-padded tail points exist
        g = c * tiles_per_slice + i
        lane = jax.lax.broadcasted_iota(jnp.int32, (1, tile_p), 1)
        d = d * ((g * tile_p + lane) < n_valid).astype(jnp.float32)
    sum_ref[...] += jnp.sum(d, axis=1, keepdims=True)
    sq_ref[...] += jnp.sum(d * d, axis=1, keepdims=True)


def _output_kernel(x_ref, w1f_ref, b1f_ref, w2_ref, s2_ref, t2_ref,
                   w3p_ref, b3p_ref, o_ref, *, use_tanh):
    """Full forward for one point tile; lane-dense (COUT_PAD, tp) output."""
    h1 = jnp.dot(w1f_ref[...], x_ref[...], preferred_element_type=jnp.float32)
    h1 = jnp.maximum(h1 + b1f_ref[...], 0.0)                # conv1+bn1+relu
    d = jnp.dot(w2_ref[...], h1.astype(jnp.bfloat16),
                preferred_element_type=jnp.float32)          # conv2 (MXU)
    h2 = jnp.maximum(d * s2_ref[...] + t2_ref[...], 0.0)     # bn2 (bias folded)+relu
    y = jnp.dot(w3p_ref[...], h2.astype(jnp.bfloat16),
                preferred_element_type=jnp.float32) + b3p_ref[...]  # conv3 (MXU)
    if use_tanh:
        y = jnp.tanh(y)
    o_ref[...] = y.astype(o_ref.dtype)


# ---------------------------------------------------------------------------
# wrapper
# ---------------------------------------------------------------------------
def _fold_bn(sum_, sumsq, count, gamma, beta):
    """Per-channel (L,1) folded BN: h_norm = h * scale + shift (batch stats)."""
    mean = sum_ / count
    var = jnp.maximum(sumsq / count - mean * mean, 0.0)       # E[h^2] - E[h]^2
    scale = jax.lax.rsqrt(var + BN_EPS) * gamma
    shift = beta - mean * scale
    return scale, shift


@functools.partial(jax.jit, static_argnames=("use_tanh", "tile_points"))
def patch_deformation_mlp(x, params, *, use_tanh=True, tile_points=4096):
    """x: (B, patchDim, N) NCW float32.  Returns (B, patchDeformDim, N)."""
    w1, b1, g1, be1, w2, b2, g2, be2, w3, b3 = params
    B, cin, N = x.shape
    L = w1.shape[0]
    cout = w3.shape[0]
    P = B * N
    count = float(P)

    # channel-major (cin, P), f32
    x_cm = jnp.transpose(x, (1, 0, 2)).reshape(cin, P)

    # ---- former pass 1 replaced by closed-form moments (conv1 is linear) ----
    sx = jnp.sum(x_cm, axis=1, keepdims=True)                 # (cin, 1)
    sxx = x_cm @ x_cm.T                                       # (cin, cin)
    w1_sx = w1 @ sx                                           # (L, 1)
    sum1 = w1_sx + count * b1
    sq1 = (jnp.sum((w1 @ sxx) * w1, axis=1, keepdims=True)    # diag(w1 Sxx w1^T)
           + 2.0 * b1 * w1_sx + count * (b1 * b1))
    s1, t1 = _fold_bn(sum1, sq1, count, g1, be1)
    w1f = s1 * w1                                             # bn1 folded into conv1
    b1f = s1 * b1 + t1

    # ---- tile geometry & padded, lane-dense operands -------------------------
    tp = _round_up(min(tile_points, _round_up(P, 128)), 128)
    P_pad = _round_up(P, NUM_SLICES * tp)
    T = P_pad // tp
    T_slice = T // NUM_SLICES
    needs_mask = P_pad != P

    cin_pad = _round_up(max(cin, CIN_PAD), 8)
    cout_pad = _round_up(max(cout, COUT_PAD), 8)

    x_pad = jnp.pad(x_cm, ((0, cin_pad - cin), (0, P_pad - P)))
    w1f_pad = jnp.pad(w1f, ((0, 0), (0, cin_pad - cin)))
    w2_bf = w2.astype(jnp.bfloat16)                           # MXU operand only
    w3_pad = jnp.pad(w3, ((0, cout_pad - cout), (0, 0))).astype(jnp.bfloat16)
    b3_pad = jnp.pad(b3, ((0, cout_pad - cout), (0, 0)))

    resident2 = lambda shape: pl.BlockSpec(shape, lambda c, i: (0, 0))
    resident1 = lambda shape: pl.BlockSpec(shape, lambda i: (0, 0))

    # ---- pass A: conv2-output statistics (per-slice partial accumulators) ----
    psum, psq = pl.pallas_call(
        functools.partial(_stats_kernel, n_valid=P, tile_p=tp,
                          tiles_per_slice=T_slice, needs_mask=needs_mask),
        grid=(NUM_SLICES, T_slice),
        in_specs=[pl.BlockSpec((cin_pad, tp), lambda c, i: (0, c * T_slice + i)),
                  resident2((L, cin_pad)), resident2((L, 1)),
                  resident2((L, L))],
        out_specs=(pl.BlockSpec((L, 1), lambda c, i: (c, 0)),
                   pl.BlockSpec((L, 1), lambda c, i: (c, 0))),
        out_shape=(jax.ShapeDtypeStruct((NUM_SLICES * L, 1), jnp.float32),) * 2,
        compiler_params=pltpu.CompilerParams(
            dimension_semantics=("parallel", "arbitrary"),
            vmem_limit_bytes=_VMEM_LIMIT),
    )(x_pad, w1f_pad, b1f, w2_bf)

    sumd = jnp.sum(psum.reshape(NUM_SLICES, L, 1), axis=0)
    sqd = jnp.sum(psq.reshape(NUM_SLICES, L, 1), axis=0)
    sum2 = sumd + count * b2                                  # re-add conv2 bias
    sq2 = sqd + 2.0 * b2 * sumd + count * (b2 * b2)
    s2, t2 = _fold_bn(sum2, sq2, count, g2, be2)
    t2b = s2 * b2 + t2                                        # fold conv2 bias into bn2

    # ---- pass B: full forward, lane-dense (cout_pad, P_pad) output -----------
    y_cm = pl.pallas_call(
        functools.partial(_output_kernel, use_tanh=use_tanh),
        grid=(T,),
        in_specs=[pl.BlockSpec((cin_pad, tp), lambda i: (0, i)),
                  resident1((L, cin_pad)), resident1((L, 1)),
                  resident1((L, L)), resident1((L, 1)), resident1((L, 1)),
                  resident1((cout_pad, L)), resident1((cout_pad, 1))],
        out_specs=pl.BlockSpec((cout_pad, tp), lambda i: (0, i)),
        out_shape=jax.ShapeDtypeStruct((cout_pad, P_pad), jnp.float32),
        compiler_params=pltpu.CompilerParams(
            dimension_semantics=("parallel",),
            vmem_limit_bytes=_VMEM_LIMIT),
    )(x_pad, w1f_pad, b1f, w2_bf, s2, t2b, w3_pad, b3_pad)

    # drop padded rows/points, back to NCW
    y_cm = y_cm[:cout, :P]
    return jnp.transpose(y_cm.reshape(cout, B, N), (1, 0, 2))


# ---------------------------------------------------------------------------
# parameters & references
# ---------------------------------------------------------------------------
def init_params(key, patch_dim=2, patch_deform_dim=3, layer_size=LAYER_SIZE):
    """Deterministic synthetic params; conv weights stored (out, in) like PyTorch."""
    ks = jax.random.split(key, 6)
    s = 0.1
    w1 = s * jax.random.normal(ks[0], (layer_size, patch_dim), jnp.float32)
    b1 = s * jax.random.normal(ks[1], (layer_size, 1), jnp.float32)
    w2 = s * jax.random.normal(ks[2], (layer_size, layer_size), jnp.float32)
    b2 = s * jax.random.normal(ks[3], (layer_size, 1), jnp.float32)
    w3 = s * jax.random.normal(ks[4], (patch_deform_dim, layer_size), jnp.float32)
    b3 = s * jax.random.normal(ks[5], (patch_deform_dim, 1), jnp.float32)
    g1 = jnp.ones((layer_size, 1), jnp.float32)
    be1 = jnp.zeros((layer_size, 1), jnp.float32)
    g2 = jnp.ones((layer_size, 1), jnp.float32)
    be2 = jnp.zeros((layer_size, 1), jnp.float32)
    return (w1, b1, g1, be1, w2, b2, g2, be2, w3, b3)


def reference_forward(x, params, *, use_tanh=True, bf16_matmul=False):
    """Pure-JAX reference of the PyTorch module (training-mode BatchNorm).

    bf16_matmul=True mirrors the kernel's bf16 conv2/conv3 matmuls (conv1 stays
    f32, like the kernel); bf16_matmul=False is the faithful f32 PyTorch math.
    """
    w1, b1, g1, be1, w2, b2, g2, be2, w3, b3 = params
    B, cin, N = x.shape
    x_cm = jnp.transpose(x, (1, 0, 2)).reshape(cin, B * N)

    def bn(h, g, be):
        mean = jnp.mean(h, axis=1, keepdims=True)
        var = jnp.mean((h - mean) ** 2, axis=1, keepdims=True)  # biased var
        return (h - mean) * jax.lax.rsqrt(var + BN_EPS) * g + be

    def mm(w, h):
        if bf16_matmul:
            return jnp.dot(w.astype(jnp.bfloat16), h.astype(jnp.bfloat16),
                           preferred_element_type=jnp.float32)
        return w @ h

    h = jnp.maximum(bn(w1 @ x_cm + b1, g1, be1), 0.0)
    h = jnp.maximum(bn(mm(w2, h) + b2, g2, be2), 0.0)
    y = mm(w3, h) + b3
    if use_tanh:
        y = jnp.tanh(y)
    return jnp.transpose(y.reshape(-1, B, N), (1, 0, 2))


if __name__ == "__main__":
    key = jax.random.PRNGKey(0)
    k_param, k_x = jax.random.split(key)

    # Small shapes; N chosen so B*N = 400 is NOT a tile multiple, exercising the
    # padded-point masking, the fully-padded slice, and multi-tile accumulation.
    B, patch_dim, N = 2, 2, 200
    params = init_params(k_param, patch_dim=patch_dim, patch_deform_dim=3)
    x = jax.random.uniform(k_x, (B, patch_dim, N), jnp.float32)

    ref_matched = reference_forward(x, params, use_tanh=True, bf16_matmul=True)
    ref_f32 = reference_forward(x, params, use_tanh=True, bf16_matmul=False)

    for tpnts in (128, 4096):   # small multi-tile case + default large-tile case
        out = patch_deformation_mlp(x, params, use_tanh=True, tile_points=tpnts)
        out = jax.block_until_ready(out)
        assert out.shape == (B, 3, N), out.shape

        # Tight check vs a reference mirroring the kernel's bf16 matmuls.
        assert jnp.allclose(out, ref_matched, atol=5e-3, rtol=5e-3), (
            f"tile_points={tpnts}: mismatch vs matched (bf16) reference: "
            f"max abs err {jnp.max(jnp.abs(out - ref_matched)):.3e}")

        # Looser check vs the faithful f32 PyTorch math (diff == bf16 matmuls).
        assert jnp.allclose(out, ref_f32, atol=5e-2, rtol=5e-2), (
            f"tile_points={tpnts}: mismatch vs f32 reference: "
            f"max abs err {jnp.max(jnp.abs(out - ref_f32)):.3e}")

    print("KERNEL_OK")
</pallas_src>

<mosaic_0001>
module attributes {stable_mosaic.version = 11 : i64} {
  func.func @_stats_kernel(%arg0: i32, %arg1: i32, %arg2: memref<8x128xf32, #tpu.memory_space<vmem>>, %arg3: memref<128x8xf32, #tpu.memory_space<vmem>>, %arg4: memref<128x1xf32, #tpu.memory_space<vmem>>, %arg5: memref<128x128xbf16, #tpu.memory_space<vmem>>, %arg6: memref<128x1xf32, #tpu.memory_space<vmem>>, %arg7: memref<128x1xf32, #tpu.memory_space<vmem>>) attributes {dimension_semantics = [#tpu.dimension_semantics<parallel>, #tpu.dimension_semantics<arbitrary>], iteration_bounds = array<i64: 2, 2>, scalar_prefetch = 0 : i64, scratch_operands = 0 : i64, tpu.core_type = #tpu.core_type<tc>, window_params = [{transform_indices = @transform_0, window_bounds = array<i64: 8, 128>}, {pipeline_mode = #tpu.pipeline_mode<synchronous>, transform_indices = @transform_1, window_bounds = array<i64: 128, 8>}, {pipeline_mode = #tpu.pipeline_mode<synchronous>, transform_indices = @transform_2, window_bounds = array<i64: 128, 1>}, {pipeline_mode = #tpu.pipeline_mode<synchronous>, transform_indices = @transform_3, window_bounds = array<i64: 128, 128>}, {transform_indices = @transform_4, window_bounds = array<i64: 128, 1>}, {transform_indices = @transform_5, window_bounds = array<i64: 128, 1>}]} {
    %c0_i32 = arith.constant 0 : i32
    %0 = arith.cmpi eq, %arg1, %c0_i32 : i32
    %1 = arith.extui %0 : i1 to i32
    %c0_i32_0 = arith.constant 0 : i32
    %2 = arith.cmpi ne, %1, %c0_i32_0 : i32
    scf.if %2 {
      %cst_20 = arith.constant 0.000000e+00 : f32
      %37 = vector.broadcast %cst_20 : f32 to vector<128x1xf32>
      %c0_21 = arith.constant 0 : index
      %c0_22 = arith.constant 0 : index
      %38 = vector.load %arg6[%c0_21, %c0_22] : memref<128x1xf32, #tpu.memory_space<vmem>>, vector<128x1xf32>
      tpu.vector_store %arg6[%c0_21, %c0_22], %37 {strides = array<i32>} : memref<128x1xf32, #tpu.memory_space<vmem>>, vector<128x1xf32>,
      %cst_23 = arith.constant 0.000000e+00 : f32
      %39 = vector.broadcast %cst_23 : f32 to vector<128x1xf32>
      %c0_24 = arith.constant 0 : index
      %c0_25 = arith.constant 0 : index
      %40 = vector.load %arg7[%c0_24, %c0_25] : memref<128x1xf32, #tpu.memory_space<vmem>>, vector<128x1xf32>
      tpu.vector_store %arg7[%c0_24, %c0_25], %39 {strides = array<i32>} : memref<128x1xf32, #tpu.memory_space<vmem>>, vector<128x1xf32>,
    } else {
    }
    %c0 = arith.constant 0 : index
    %c0_1 = arith.constant 0 : index
    %3 = vector.load %arg3[%c0, %c0_1] : memref<128x8xf32, #tpu.memory_space<vmem>>, vector<128x8xf32>
    %c0_2 = arith.constant 0 : index
    %c0_3 = arith.constant 0 : index
    %4 = vector.load %arg2[%c0_2, %c0_3] : memref<8x128xf32, #tpu.memory_space<vmem>>, vector<8x128xf32>
    %cst = arith.constant dense<0.000000e+00> : vector<128x128xf32>
    %5 = tpu.matmul %3, %4, %cst {dimension_numbers = #tpu.dot_dimension_numbers<[1], [0], [0], [1], [0, 0, 1, 1], [], []>} : vector<128x8xf32>, vector<8x128xf32>, vector<128x128xf32> -> vector<128x128xf32>
    %c0_4 = arith.constant 0 : index
    %c0_5 = arith.constant 0 : index
    %6 = vector.load %arg4[%c0_4, %c0_5] : memref<128x1xf32, #tpu.memory_space<vmem>>, vector<128x1xf32>
    %7 = vector.broadcast %6 : vector<128x1xf32> to vector<128x128xf32>
    %8 = arith.addf %5, %7 : vector<128x128xf32>
    %cst_6 = arith.constant 0.000000e+00 : f32
    %9 = vector.broadcast %cst_6 : f32 to vector<128x128xf32>
    %10 = arith.maximumf %8, %9 : vector<128x128xf32>
    %c0_7 = arith.constant 0 : index
    %c0_8 = arith.constant 0 : index
    %11 = vector.load %arg5[%c0_7, %c0_8] : memref<128x128xbf16, #tpu.memory_space<vmem>>, vector<128x128xbf16>
    %12 = arith.truncf %10 : vector<128x128xf32> to vector<128x128xbf16>
    %cst_9 = arith.constant dense<0.000000e+00> : vector<128x128xf32>
    %13 = tpu.matmul %11, %12, %cst_9 {dimension_numbers = #tpu.dot_dimension_numbers<[1], [0], [0], [1], [0, 0, 1, 1], [], []>} : vector<128x128xbf16>, vector<128x128xbf16>, vector<128x128xf32> -> vector<128x128xf32>
    %c2_i32 = arith.constant 2 : i32
    %14 = arith.muli %arg0, %c2_i32 : i32
    %15 = arith.addi %14, %arg1 : i32
    %16 = tpu.iota {dimensions = array<i32: 1>} : vector<1x128xi32>
    %c128_i32 = arith.constant 128 : i32
    %17 = arith.muli %15, %c128_i32 : i32
    %18 = vector.broadcast %17 : i32 to vector<1x128xi32>
    %19 = arith.addi %18, %16 : vector<1x128xi32>
    %c400_i32 = arith.constant 400 : i32
    %20 = vector.broadcast %c400_i32 : i32 to vector<1x128xi32>
    %21 = arith.cmpi slt, %19, %20 : vector<1x128xi32>
    %22 = arith.extui %21 : vector<1x128xi1> to vector<1x128xi32>
    %23 = arith.sitofp %22 : vector<1x128xi32> to vector<1x128xf32>
    %24 = vector.broadcast %23 : vector<1x128xf32> to vector<128x128xf32>
    %25 = arith.mulf %13, %24 : vector<128x128xf32>
    %c0_10 = arith.constant 0 : index
    %c0_11 = arith.constant 0 : index
    %26 = vector.load %arg6[%c0_10, %c0_11] : memref<128x1xf32, #tpu.memory_space<vmem>>, vector<128x1xf32>
    %cst_12 = arith.constant dense<0.000000e+00> : vector<128xf32>
    %27 = vector.multi_reduction <add>, %25, %cst_12 [1] : vector<128x128xf32> to vector<128xf32>
    %28 = vector.shape_cast %27 : vector<128xf32> to vector<128x1xf32>
    %29 = arith.addf %26, %28 : vector<128x1xf32>
    %c0_13 = arith.constant 0 : index
    %c0_14 = arith.constant 0 : index
    %30 = vector.load %arg6[%c0_13, %c0_14] : memref<128x1xf32, #tpu.memory_space<vmem>>, vector<128x1xf32>
    tpu.vector_store %arg6[%c0_13, %c0_14], %29 {strides = array<i32>} : memref<128x1xf32, #tpu.memory_space<vmem>>, vector<128x1xf32>,
    %c0_15 = arith.constant 0 : index
    %c0_16 = arith.constant 0 : index
    %31 = vector.load %arg7[%c0_15, %c0_16] : memref<128x1xf32, #tpu.memory_space<vmem>>, vector<128x1xf32>
    %32 = arith.mulf %25, %25 : vector<128x128xf32>
    %cst_17 = arith.constant dense<0.000000e+00> : vector<128xf32>
    %33 = vector.multi_reduction <add>, %32, %cst_17 [1] : vector<128x128xf32> to vector<128xf32>
    %34 = vector.shape_cast %33 : vector<128xf32> to vector<128x1xf32>
    %35 = arith.addf %31, %34 : vector<128x1xf32>
    %c0_18 = arith.constant 0 : index
    %c0_19 = arith.constant 0 : index
    %36 = vector.load %arg7[%c0_18, %c0_19] : memref<128x1xf32, #tpu.memory_space<vmem>>, vector<128x1xf32>
    tpu.vector_store %arg7[%c0_18, %c0_19], %35 {strides = array<i32>} : memref<128x1xf32, #tpu.memory_space<vmem>>, vector<128x1xf32>,
    return
  }
  func.func @transform_0(%arg0: i32, %arg1: i32) -> (i32, i32) {
    %c2_i32 = arith.constant 2 : i32
    %0 = arith.muli %arg0, %c2_i32 : i32
    %1 = arith.addi %0, %arg1 : i32
    %c0_i32 = arith.constant 0 : i32
    %c0_i32_0 = arith.constant 0 : i32
    return %c0_i32, %1 : i32, i32
  }
  func.func @transform_1(%arg0: i32, %arg1: i32) -> (i32, i32) {
    %c0_i32 = arith.constant 0 : i32
    %c0_i32_0 = arith.constant 0 : i32
    %c0_i32_1 = arith.constant 0 : i32
    return %c0_i32, %c0_i32_0 : i32, i32
  }
  func.func @transform_2(%arg0: i32, %arg1: i32) -> (i32, i32) {
    %c0_i32 = arith.constant 0 : i32
    %c0_i32_0 = arith.constant 0 : i32
    %c0_i32_1 = arith.constant 0 : i32
    return %c0_i32, %c0_i32_0 : i32, i32
  }
  func.func @transform_3(%arg0: i32, %arg1: i32) -> (i32, i32) {
    %c0_i32 = arith.constant 0 : i32
    %c0_i32_0 = arith.constant 0 : i32
    %c0_i32_1 = arith.constant 0 : i32
    return %c0_i32, %c0_i32_0 : i32, i32
  }
  func.func @transform_4(%arg0: i32, %arg1: i32) -> (i32, i32) {
    %c0_i32 = arith.constant 0 : i32
    %c0_i32_0 = arith.constant 0 : i32
    return %arg0, %c0_i32 : i32, i32
  }
  func.func @transform_5(%arg0: i32, %arg1: i32) -> (i32, i32) {
    %c0_i32 = arith.constant 0 : i32
    %c0_i32_0 = arith.constant 0 : i32
    return %arg0, %c0_i32 : i32, i32
  }
}

module attributes {stable_mosaic.version = 11 : i64} {
  func.func @_output_kernel(%arg0: i32, %arg1: memref<8x128xf32, #tpu.memory_space<vmem>>, %arg2: memref<128x8xf32, #tpu.memory_space<vmem>>, %arg3: memref<128x1xf32, #tpu.memory_space<vmem>>, %arg4: memref<128x128xbf16, #tpu.memory_space<vmem>>, %arg5: memref<128x1xf32, #tpu.memory_space<vmem>>, %arg6: memref<128x1xf32, #tpu.memory_space<vmem>>, %arg7: memref<8x128xbf16, #tpu.memory_space<vmem>>, %arg8: memref<8x1xf32, #tpu.memory_space<vmem>>, %arg9: memref<8x128xf32, #tpu.memory_space<vmem>>) attributes {dimension_semantics = [#tpu.dimension_semantics<parallel>], iteration_bounds = array<i64: 4>, scalar_prefetch = 0 : i64, scratch_operands = 0 : i64, tpu.core_type = #tpu.core_type<tc>, window_params = [{transform_indices = @transform_0, window_bounds = array<i64: 8, 128>}, {pipeline_mode = #tpu.pipeline_mode<synchronous>, transform_indices = @transform_1, window_bounds = array<i64: 128, 8>}, {pipeline_mode = #tpu.pipeline_mode<synchronous>, transform_indices = @transform_2, window_bounds = array<i64: 128, 1>}, {pipeline_mode = #tpu.pipeline_mode<synchronous>, transform_indices = @transform_3, window_bounds = array<i64: 128, 128>}, {pipeline_mode = #tpu.pipeline_mode<synchronous>, transform_indices = @transform_4, window_bounds = array<i64: 128, 1>}, {pipeline_mode = #tpu.pipeline_mode<synchronous>, transform_indices = @transform_5, window_bounds = array<i64: 128, 1>}, {pipeline_mode = #tpu.pipeline_mode<synchronous>, transform_indices = @transform_6, window_bounds = array<i64: 8, 128>}, {pipeline_mode = #tpu.pipeline_mode<synchronous>, transform_indices = @transform_7, window_bounds = array<i64: 8, 1>}, {transform_indices = @transform_8, window_bounds = array<i64: 8, 128>}]} {
    %c0 = arith.constant 0 : index
    %c0_0 = arith.constant 0 : index
    %0 = vector.load %arg2[%c0, %c0_0] : memref<128x8xf32, #tpu.memory_space<vmem>>, vector<128x8xf32>
    %c0_1 = arith.constant 0 : index
    %c0_2 = arith.constant 0 : index
    %1 = vector.load %arg1[%c0_1, %c0_2] : memref<8x128xf32, #tpu.memory_space<vmem>>, vector<8x128xf32>
    %cst = arith.constant dense<0.000000e+00> : vector<128x128xf32>
    %2 = tpu.matmul %0, %1, %cst {dimension_numbers = #tpu.dot_dimension_numbers<[1], [0], [0], [1], [0, 0, 1, 1], [], []>} : vector<128x8xf32>, vector<8x128xf32>, vector<128x128xf32> -> vector<128x128xf32>
    %c0_3 = arith.constant 0 : index
    %c0_4 = arith.constant 0 : index
    %3 = vector.load %arg3[%c0_3, %c0_4] : memref<128x1xf32, #tpu.memory_space<vmem>>, vector<128x1xf32>
    %4 = vector.broadcast %3 : vector<128x1xf32> to vector<128x128xf32>
    %5 = arith.addf %2, %4 : vector<128x128xf32>
    %cst_5 = arith.constant 0.000000e+00 : f32
    %6 = vector.broadcast %cst_5 : f32 to vector<128x128xf32>
    %7 = arith.maximumf %5, %6 : vector<128x128xf32>
    %c0_6 = arith.constant 0 : index
    %c0_7 = arith.constant 0 : index
    %8 = vector.load %arg4[%c0_6, %c0_7] : memref<128x128xbf16, #tpu.memory_space<vmem>>, vector<128x128xbf16>
    %9 = arith.truncf %7 : vector<128x128xf32> to vector<128x128xbf16>
    %cst_8 = arith.constant dense<0.000000e+00> : vector<128x128xf32>
    %10 = tpu.matmul %8, %9, %cst_8 {dimension_numbers = #tpu.dot_dimension_numbers<[1], [0], [0], [1], [0, 0, 1, 1], [], []>} : vector<128x128xbf16>, vector<128x128xbf16>, vector<128x128xf32> -> vector<128x128xf32>
    %c0_9 = arith.constant 0 : index
    %c0_10 = arith.constant 0 : index
    %11 = vector.load %arg5[%c0_9, %c0_10] : memref<128x1xf32, #tpu.memory_space<vmem>>, vector<128x1xf32>
    %12 = vector.broadcast %11 : vector<128x1xf32> to vector<128x128xf32>
    %13 = arith.mulf %10, %12 : vector<128x128xf32>
    %c0_11 = arith.constant 0 : index
    %c0_12 = arith.constant 0 : index
    %14 = vector.load %arg6[%c0_11, %c0_12] : memref<128x1xf32, #tpu.memory_space<vmem>>, vector<128x1xf32>
    %15 = vector.broadcast %14 : vector<128x1xf32> to vector<128x128xf32>
    %16 = arith.addf %13, %15 : vector<128x128xf32>
    %cst_13 = arith.constant 0.000000e+00 : f32
    %17 = vector.broadcast %cst_13 : f32 to vector<128x128xf32>
    %18 = arith.maximumf %16, %17 : vector<128x128xf32>
    %c0_14 = arith.constant 0 : index
    %c0_15 = arith.constant 0 : index
    %19 = vector.load %arg7[%c0_14, %c0_15] : memref<8x128xbf16, #tpu.memory_space<vmem>>, vector<8x128xbf16>
    %20 = arith.truncf %18 : vector<128x128xf32> to vector<128x128xbf16>
    %cst_16 = arith.constant dense<0.000000e+00> : vector<8x128xf32>
    %21 = tpu.matmul %19, %20, %cst_16 {dimension_numbers = #tpu.dot_dimension_numbers<[1], [0], [0], [1], [0, 0, 1, 1], [], []>} : vector<8x128xbf16>, vector<128x128xbf16>, vector<8x128xf32> -> vector<8x128xf32>
    %c0_17 = arith.constant 0 : index
    %c0_18 = arith.constant 0 : index
    %22 = vector.load %arg8[%c0_17, %c0_18] : memref<8x1xf32, #tpu.memory_space<vmem>>, vector<8x1xf32>
    %23 = vector.broadcast %22 : vector<8x1xf32> to vector<8x128xf32>
    %24 = arith.addf %21, %23 : vector<8x128xf32>
    %25 = math.tanh %24 : vector<8x128xf32>
    %c0_19 = arith.constant 0 : index
    %c0_20 = arith.constant 0 : index
    %26 = vector.load %arg9[%c0_19, %c0_20] : memref<8x128xf32, #tpu.memory_space<vmem>>, vector<8x128xf32>
    tpu.vector_store %arg9[%c0_19, %c0_20], %25 {strides = array<i32>} : memref<8x128xf32, #tpu.memory_space<vmem>>, vector<8x128xf32>,
    return
  }
  func.func @transform_0(%arg0: i32) -> (i32, i32) {
    %c0_i32 = arith.constant 0 : i32
    %c0_i32_0 = arith.constant 0 : i32
    return %c0_i32, %arg0 : i32, i32
  }
  func.func @transform_1(%arg0: i32) -> (i32, i32) {
    %c0_i32 = arith.constant 0 : i32
    %c0_i32_0 = arith.constant 0 : i32
    %c0_i32_1 = arith.constant 0 : i32
    return %c0_i32, %c0_i32_0 : i32, i32
  }
  func.func @transform_2(%arg0: i32) -> (i32, i32) {
    %c0_i32 = arith.constant 0 : i32
    %c0_i32_0 = arith.constant 0 : i32
    %c0_i32_1 = arith.constant 0 : i32
    return %c0_i32, %c0_i32_0 : i32, i32
  }
  func.func @transform_3(%arg0: i32) -> (i32, i32) {
    %c0_i32 = arith.constant 0 : i32
    %c0_i32_0 = arith.constant 0 : i32
    %c0_i32_1 = arith.constant 0 : i32
    return %c0_i32, %c0_i32_0 : i32, i32
  }
  func.func @transform_4(%arg0: i32) -> (i32, i32) {
    %c0_i32 = arith.constant 0 : i32
    %c0_i32_0 = arith.constant 0 : i32
    %c0_i32_1 = arith.constant 0 : i32
    return %c0_i32, %c0_i32_0 : i32, i32
  }
  func.func @transform_5(%arg0: i32) -> (i32, i32) {
    %c0_i32 = arith.constant 0 : i32
    %c0_i32_0 = arith.constant 0 : i32
    %c0_i32_1 = arith.constant 0 : i32
    return %c0_i32, %c0_i32_0 : i32, i32
  }
  func.func @transform_6(%arg0: i32) -> (i32, i32) {
    %c0_i32 = arith.constant 0 : i32
    %c0_i32_0 = arith.constant 0 : i32
    %c0_i32_1 = arith.constant 0 : i32
    return %c0_i32, %c0_i32_0 : i32, i32
  }
  func.func @transform_7(%arg0: i32) -> (i32, i32) {
    %c0_i32 = arith.constant 0 : i32
    %c0_i32_0 = arith.constant 0 : i32
    %c0_i32_1 = arith.constant 0 : i32
    return %c0_i32, %c0_i32_0 : i32, i32
  }
  func.func @transform_8(%arg0: i32) -> (i32, i32) {
    %c0_i32 = arith.constant 0 : i32
    %c0_i32_0 = arith.constant 0 : i32
    return %c0_i32, %arg0 : i32, i32
  }
}

</mosaic_0001>

<llo_original>
// kernel: sub.5
$region0: #{sub.5}
  #allocation0 [shape = 's32[1]{0}', space=sflag, size = 0x4, scoped, tag = 'scoped memory for sub.5']
  %s0 = inlined_call_operand.vmem [shape: f32[128,1], index: 0, kind: input, shape index: {}]
  %s1 = inlined_call_operand.vmem [shape: f32[128,1], index: 1, kind: input, shape index: {}]
  %s2 = inlined_call_operand.vmem [shape: f32[128,1], index: 2, kind: output, shape index: {}]
  %v3 = vld [vmem:[%s0] sm:$0x1]
  %v4 = vld [vmem:[%s1] sm:$0x1]
  %5 = xla_tuple %v3, %v4
  %6 = xla_tuple %5
  %v7 = vsub.f32 %v3, %v4
  %8 = xla_tuple %v7
  %9 = vst [vmem:[%s2] sm:$0x1] %v7

// kernel: patch_deformation_mlp.3
$region0: #{patch_deformation_mlp.3}
  #allocation0 [shape = 'u32[]', space=smem, size = 0x4, offset = 0x4, fixed_abs, tag = 'smem constant byte address 0x4 - core index']
  #allocation1 [shape = 'u32[144,128]{1,0:T(1,128)}', space=vmem, size = 0x12000, scoped, tag = 'internal scratch']
  %s0 = inlined_call_operand.vmem [shape: f32[8,512], index: 0, kind: input, shape index: {}]
  %s1 = inlined_call_operand.vmem [shape: f32[128,8], index: 1, kind: input, shape index: {}]
  %s2 = inlined_call_operand.vmem [shape: f32[128,1], index: 2, kind: input, shape index: {}]
  %s3 = inlined_call_operand.vmem [shape: bf16[128,128], index: 3, kind: input, shape index: {}]
  %s4 = inlined_call_operand.vmem [shape: f32[128,1], index: 4, kind: input, shape index: {}]
  %s5 = inlined_call_operand.vmem [shape: f32[128,1], index: 5, kind: input, shape index: {}]
  %s6 = inlined_call_operand.vmem [shape: bf16[8,128], index: 6, kind: input, shape index: {}]
  %s7 = inlined_call_operand.vmem [shape: f32[8,1], index: 7, kind: input, shape index: {}]
  %s8 = inlined_call_operand.vmem [shape: f32[8,512], index: 8, kind: output, shape index: {}]
  %s9 = sld [smem:[#allocation0]]
  $region65: #{patch_deformation_mlp.3} parent=0
    _
  %s11 = ssub.s32 1, %s9
  %s12 = scalar_select 0, %s11, %s9
  loop: start=0, step=1, limit=6
  $region2: #{patch_deformation_mlp.3} parent=0 // loop_pre_header
    _
  $region3: #{patch_deformation_mlp.3} parent=0 // loop_header
    %s14 = sphi 0, %s18
    %p15 = scmp.ge.s32.totalorder %s14, 6
    %s24 = sphi 0, %s26
    %s27 = sphi 0, %s24
    %s28 = sphi 0, %s27
    %s44 = sphi 0, %s28
    %s48 = sphi 0, %s48
    %s50 = sphi 0, %s48
    %s51 = sphi 0, %s50
    %s65 = sphi 0, %s51
    %s69 = sphi 0, %s69
    %s71 = sphi 0, %s69
    %s72 = sphi 0, %s71
    %s86 = sphi 0, %s72
    %s90 = sphi 0, %s90
    %s92 = sphi 0, %s90
    %s93 = sphi 0, %s92
    %s107 = sphi 0, %s93
    %s111 = sphi 0, %s111
    %s113 = sphi 0, %s111
    %s114 = sphi 0, %s113
    %s128 = sphi 0, %s114
    %s132 = sphi 0, %s132
    %s134 = sphi 0, %s132
    %s135 = sphi 0, %s134
    %s149 = sphi 0, %s135
    %s153 = sphi 0, %s153
    %s155 = sphi 0, %s153
    %s156 = sphi 0, %s155
    %s170 = sphi 0, %s156
    %s174 = sphi 0, %s174
    %s176 = sphi 0, %s174
    %s177 = sphi 0, %s176
    %s191 = sphi 0, %s177
    %s197 = sphi 0, %s199
    %s200 = sphi 0, %s197
    %s201 = sphi 0, %s200
    %s217 = sphi 0, %s201
  $region4: #{patch_deformation_mlp.3} parent=0 // loop_header_branch
    %17 = sbr.rel (%p15) target = $region8
  $region5: #{patch_deformation_mlp.3} parent=0 // loop_body
    %s19 = ssub.s32 %s14, 1
    %s20 = ssub.s32 %s14, 2
    %s21 = sadd.s32 %s14, 1
    %s22 = ssub.s32 %s14, %s21
    %p23 = scmp.eq.s32.totalorder %s22, 0
    %s25 = sadd.s32 %s24, 1
    %s26 = scalar_select %p23, %s24, %s25
    %p29 = pneg %p23
    %p30 = scmp.eq.s32.totalorder %s14, 3
    %p31 = por %p29, %p30
    %p32 = scmp.ne.s32.totalorder %s24, %s27
    %p33 = scmp.eq.s32.totalorder %s14, 0
    %p34 = por %p32, %p33
    %p35 = scmp.ne.s32.totalorder %s24, %s27
    %p36 = scmp.eq.s32.totalorder %s19, 3
    %p37 = por %p35, %p36
    %p38 = scmp.ne.s32.totalorder %s27, %s28
    %p39 = scmp.eq.s32.totalorder %s19, 0
    %p40 = por %p38, %p39
    %p41 = scmp.ne.s32.totalorder %s27, %s28
    %p42 = scmp.eq.s32.totalorder %s20, 3
    %p43 = por %p41, %p42
    %p45 = scmp.ne.s32.totalorder %s28, %s44
    %p46 = scmp.eq.s32.totalorder %s20, 0
    %p47 = por %p45, %p46
    %s49 = sadd.s32 %s48, 1
    %p52 = scmp.eq.s32.totalorder %s14, 3
    %p53 = scmp.ne.s32.totalorder %s48, %s50
    %p54 = scmp.eq.s32.totalorder %s14, 0
    %p55 = por %p53, %p54
    %p56 = scmp.ne.s32.totalorder %s48, %s50
    %p57 = scmp.eq.s32.totalorder %s19, 3
    %p58 = por %p56, %p57
    %p59 = scmp.ne.s32.totalorder %s50, %s51
    %p60 = scmp.eq.s32.totalorder %s19, 0
    %p61 = por %p59, %p60
    %p62 = scmp.ne.s32.totalorder %s50, %s51
    %p63 = scmp.eq.s32.totalorder %s20, 3
    %p64 = por %p62, %p63
    %p66 = scmp.ne.s32.totalorder %s51, %s65
    %p67 = scmp.eq.s32.totalorder %s20, 0
    %p68 = por %p66, %p67
    %s70 = sadd.s32 %s69, 1
    %p73 = scmp.eq.s32.totalorder %s14, 3
    %p74 = scmp.ne.s32.totalorder %s69, %s71
    %p75 = scmp.eq.s32.totalorder %s14, 0
    %p76 = por %p74, %p75
    %p77 = scmp.ne.s32.totalorder %s69, %s71
    %p78 = scmp.eq.s32.totalorder %s19, 3
    %p79 = por %p77, %p78
    %p80 = scmp.ne.s32.totalorder %s71, %s72
    %p81 = scmp.eq.s32.totalorder %s19, 0
    %p82 = por %p80, %p81
    %p83 = scmp.ne.s32.totalorder %s71, %s72
    %p84 = scmp.eq.s32.totalorder %s20, 3
    %p85 = por %p83, %p84
    %p87 = scmp.ne.s32.totalorder %s72, %s86
    %p88 = scmp.eq.s32.totalorder %s20, 0
    %p89 = por %p87, %p88
    %s91 = sadd.s32 %s90, 1
    %p94 = scmp.eq.s32.totalorder %s14, 3
    %p95 = scmp.ne.s32.totalorder %s90, %s92
    %p96 = scmp.eq.s32.totalorder %s14, 0
    %p97 = por %p95, %p96
    %p98 = scmp.ne.s32.totalorder %s90, %s92
    %p99 = scmp.eq.s32.totalorder %s19, 3
    %p100 = por %p98, %p99
    %p101 = scmp.ne.s32.totalorder %s92, %s93
    %p102 = scmp.eq.s32.totalorder %s19, 0
    %p103 = por %p101, %p102
    %p104 = scmp.ne.s32.totalorder %s92, %s93
    %p105 = scmp.eq.s32.totalorder %s20, 3
    %p106 = por %p104, %p105
    %p108 = scmp.ne.s32.totalorder %s93, %s107
    %p109 = scmp.eq.s32.totalorder %s20, 0
    %p110 = por %p108, %p109
    %s112 = sadd.s32 %s111, 1
    %p115 = scmp.eq.s32.totalorder %s14, 3
    %p116 = scmp.ne.s32.totalorder %s111, %s113
    %p117 = scmp.eq.s32.totalorder %s14, 0
    %p118 = por %p116, %p117
    %p119 = scmp.ne.s32.totalorder %s111, %s113
    %p120 = scmp.eq.s32.totalorder %s19, 3
    %p121 = por %p119, %p120
    %p122 = scmp.ne.s32.totalorder %s113, %s114
    %p123 = scmp.eq.s32.totalorder %s19, 0
    %p124 = por %p122, %p123
    %p125 = scmp.ne.s32.totalorder %s113, %s114
    %p126 = scmp.eq.s32.totalorder %s20, 3
    %p127 = por %p125, %p126
    %p129 = scmp.ne.s32.totalorder %s114, %s128
    %p130 = scmp.eq.s32.totalorder %s20, 0
    %p131 = por %p129, %p130
    %s133 = sadd.s32 %s132, 1
    %p136 = scmp.eq.s32.totalorder %s14, 3
    %p137 = scmp.ne.s32.totalorder %s132, %s134
    %p138 = scmp.eq.s32.totalorder %s14, 0
    %p139 = por %p137, %p138
    %p140 = scmp.ne.s32.totalorder %s132, %s134
    %p141 = scmp.eq.s32.totalorder %s19, 3
    %p142 = por %p140, %p141
    %p143 = scmp.ne.s32.totalorder %s134, %s135
    %p144 = scmp.eq.s32.totalorder %s19, 0
    %p145 = por %p143, %p144
    %p146 = scmp.ne.s32.totalorder %s134, %s135
    %p147 = scmp.eq.s32.totalorder %s20, 3
    %p148 = por %p146, %p147
    %p150 = scmp.ne.s32.totalorder %s135, %s149
    %p151 = scmp.eq.s32.totalorder %s20, 0
    %p152 = por %p150, %p151
    %s154 = sadd.s32 %s153, 1
    %p157 = scmp.eq.s32.totalorder %s14, 3
    %p158 = scmp.ne.s32.totalorder %s153, %s155
    %p159 = scmp.eq.s32.totalorder %s14, 0
    %p160 = por %p158, %p159
    %p161 = scmp.ne.s32.totalorder %s153, %s155
    %p162 = scmp.eq.s32.totalorder %s19, 3
    %p163 = por %p161, %p162
    %p164 = scmp.ne.s32.totalorder %s155, %s156
    %p165 = scmp.eq.s32.totalorder %s19, 0
    %p166 = por %p164, %p165
    %p167 = scmp.ne.s32.totalorder %s155, %s156
    %p168 = scmp.eq.s32.totalorder %s20, 3
    %p169 = por %p167, %p168
    %p171 = scmp.ne.s32.totalorder %s156, %s170
    %p172 = scmp.eq.s32.totalorder %s20, 0
    %p173 = por %p171, %p172
    %s175 = sadd.s32 %s174, 1
    %p178 = scmp.eq.s32.totalorder %s14, 3
    %p179 = scmp.ne.s32.totalorder %s174, %s176
    %p180 = scmp.eq.s32.totalorder %s14, 0
    %p181 = por %p179, %p180
    %p182 = scmp.ne.s32.totalorder %s174, %s176
    %p183 = scmp.eq.s32.totalorder %s19, 3
    %p184 = por %p182, %p183
    %p185 = scmp.ne.s32.totalorder %s176, %s177
    %p186 = scmp.eq.s32.totalorder %s19, 0
    %p187 = por %p185, %p186
    %p188 = scmp.ne.s32.totalorder %s176, %s177
    %p189 = scmp.eq.s32.totalorder %s20, 3
    %p190 = por %p188, %p189
    %p192 = scmp.ne.s32.totalorder %s177, %s191
    %p193 = scmp.eq.s32.totalorder %s20, 0
    %p194 = por %p192, %p193
    %s195 = ssub.s32 %s14, %s21
    %p196 = scmp.eq.s32.totalorder %s195, 0
    %s198 = sadd.s32 %s197, 1
    %s199 = scalar_select %p196, %s197, %s198
    %p202 = pneg %p196
    %p203 = scmp.eq.s32.totalorder %s14, 3
    %p204 = por %p202, %p203
    %p205 = scmp.ne.s32.totalorder %s197, %s200
    %p206 = scmp.eq.s32.totalorder %s14, 0
    %p207 = por %p205, %p206
    %p208 = scmp.ne.s32.totalorder %s197, %s200
    %p209 = scmp.eq.s32.totalorder %s19, 3
    %p210 = por %p208, %p209
    %p211 = scmp.ne.s32.totalorder %s200, %s201
    %p212 = scmp.eq.s32.totalorder %s19, 0
    %p213 = por %p211, %p212
    %p214 = scmp.ne.s32.totalorder %s200, %s201
    %p215 = scmp.eq.s32.totalorder %s20, 3
    %p216 = por %p214, %p215
    %p218 = scmp.ne.s32.totalorder %s201, %s217
    %p219 = scmp.eq.s32.totalorder %s20, 0
    %p220 = por %p218, %p219
    %p221 = scmp.le.s32.totalorder 1, %s14
    %p222 = scmp.lt.s32.totalorder %s14, 5
    %p223 = pnand %p221, %p222
    %p224 = pneg %p223
    // Predicated region
    $region9: #{patch_deformation_mlp.3} parent=5 // pred_check
      _
    $region10: #{patch_deformation_mlp.3} parent=5 // pred_check_branch
      %226 = sbr.rel (%p223) target = $region12
    $region11: #{patch_deformation_mlp.3} parent=5 // pred_region
      %s227 = ssub.s32 %s14, 1
      // Predicated region
      $region13: #{patch_deformation_mlp.3} parent=11 // pred_check
        %p228 = pneg %p61
      $region14: #{patch_deformation_mlp.3} parent=11 // pred_check_branch
        %230 = sbr.rel (%p228) target = $region16
      $region15: #{patch_deformation_mlp.3} parent=11 // pred_region
        _
      $region16: #{patch_deformation_mlp.3} parent=11 // pred_fallthru
        _
      // Predicated region
      $region17: #{patch_deformation_mlp.3} parent=11 // pred_check
        %p231 = pneg %p82
      $region18: #{patch_deformation_mlp.3} parent=11 // pred_check_branch
        %233 = sbr.rel (%p231) target = $region20
      $region19: #{patch_deformation_mlp.3} parent=11 // pred_region
        _
      $region20: #{patch_deformation_mlp.3} parent=11 // pred_fallthru
        _
      // Predicated region
      $region21: #{patch_deformation_mlp.3} parent=11 // pred_check
        %p234 = pneg %p103
      $region22: #{patch_deformation_mlp.3} parent=11 // pred_check_branch
        %236 = sbr.rel (%p234) target = $region24
      $region23: #{patch_deformation_mlp.3} parent=11 // pred_region
        _
      $region24: #{patch_deformation_mlp.3} parent=11 // pred_fallthru
        _
      // Predicated region
      $region25: #{patch_deformation_mlp.3} parent=11 // pred_check
        %p237 = pneg %p124
      $region26: #{patch_deformation_mlp.3} parent=11 // pred_check_branch
        %239 = sbr.rel (%p237) target = $region28
      $region27: #{patch_deformation_mlp.3} parent=11 // pred_region
        _
      $region28: #{patch_deformation_mlp.3} parent=11 // pred_fallthru
        _
      // Predicated region
      $region29: #{patch_deformation_mlp.3} parent=11 // pred_check
        %p240 = pneg %p145
      $region30: #{patch_deformation_mlp.3} parent=11 // pred_check_branch
        %242 = sbr.rel (%p240) target = $region32
      $region31: #{patch_deformation_mlp.3} parent=11 // pred_region
        _
      $region32: #{patch_deformation_mlp.3} parent=11 // pred_fallthru
        _
      // Predicated region
      $region33: #{patch_deformation_mlp.3} parent=11 // pred_check
        %p243 = pneg %p166
      $region34: #{patch_deformation_mlp.3} parent=11 // pred_check_branch
        %245 = sbr.rel (%p243) target = $region36
      $region35: #{patch_deformation_mlp.3} parent=11 // pred_region
        _
      $region36: #{patch_deformation_mlp.3} parent=11 // pred_fallthru
        _
      // Predicated region
      $region37: #{patch_deformation_mlp.3} parent=11 // pred_check
        %p246 = pneg %p187
      $region38: #{patch_deformation_mlp.3} parent=11 // pred_check_branch
        %248 = sbr.rel (%p246) target = $region40
      $region39: #{patch_deformation_mlp.3} parent=11 // pred_region
        _
      $region40: #{patch_deformation_mlp.3} parent=11 // pred_fallthru
        _
    $region12: #{patch_deformation_mlp.3} parent=5 // pred_fallthru
      _
    %p249 = scmp.lt.s32.totalorder %s14, 4
    // Predicated region
    $region41: #{patch_deformation_mlp.3} parent=5 // pred_check
      %p250 = pneg %p249
    $region42: #{patch_deformation_mlp.3} parent=5 // pred_check_branch
      %252 = sbr.rel (%p250) target = $region44
    $region43: #{patch_deformation_mlp.3} parent=5 // pred_region
      // Predicated region
      $region45: #{patch_deformation_mlp.3} parent=43 // pred_check
        %p253 = pneg %p34
      $region46: #{patch_deformation_mlp.3} parent=43 // pred_check_branch
        %255 = sbr.rel (%p253) target = $region48
      $region47: #{patch_deformation_mlp.3} parent=43 // pred_region
        %p256 = scmp.lt.s32.totalorder %s14, 3
        %s257 = scalar_select %p256, %s14, 3
        %s258 = smul.addr %s257, 8
        %s259 = scalar_lea.vmem %s0, %s258
      $region48: #{patch_deformation_mlp.3} parent=43 // pred_fallthru
        _
    $region44: #{patch_deformation_mlp.3} parent=5 // pred_fallthru
      _
    %p260 = scmp.le.s32.totalorder 1, %s14
    %p261 = scmp.lt.s32.totalorder %s14, 5
    %p262 = pnand %p260, %p261
    %p263 = pneg %p262
    // Predicated region
    $region49: #{patch_deformation_mlp.3} parent=5 // pred_check
      _
    $region50: #{patch_deformation_mlp.3} parent=5 // pred_check_branch
      %265 = sbr.rel (%p262) target = $region52
    $region51: #{patch_deformation_mlp.3} parent=5 // pred_region
      %s266 = ssub.s32 %s14, 1
      %p267 = scmp.lt.s32.totalorder %s19, 3
      %s268 = scalar_select %p267, %s19, 3
      %s269 = smul.addr %s268, 8
      %s270 = scalar_lea.vmem %s0, %s269
      %p271 = pneg %p40
      %p272 = pneg %p37
      %p273 = pneg %p61
      %p274 = pneg %p58
      %p275 = pneg %p82
      %p276 = pneg %p79
      %p277 = pneg %p103
      %p278 = pneg %p100
      %p279 = pneg %p124
      %p280 = pneg %p121
      %p281 = pneg %p145
      %p282 = pneg %p142
      %p283 = pneg %p166
      %p284 = pneg %p163
      %p285 = pneg %p187
      %p286 = pneg %p184
      %p287 = pneg %p213
      %p288 = pneg %p210
      %p289 = scmp.lt.s32.totalorder %s19, 3
      %s290 = scalar_select %p289, %s19, 3
      %s291 = smul.addr %s290, 8
      %s292 = scalar_lea.vmem %s8, %s291
      %p293 = scmp.lt.s32.totalorder %s19, 3
      %s294 = scalar_select %p293, %s19, 3
      %s295 = smul.addr %s294, 8
      %s296 = scalar_lea.vmem %s0, %s295
      %p297 = scmp.lt.s32.totalorder %s19, 3
      %s298 = scalar_select %p297, %s19, 3
      %s299 = smul.addr %s298, 8
      %s300 = scalar_lea.vmem %s8, %s299
      %v302 = vld [vmem:[%s1] sm:$0xff]
      %v303 = vld [vmem:[%s1 + $0x8] sm:$0xff]
      %v304 = vld [vmem:[%s1 + $0x10] sm:$0xff]
      %v305 = vld [vmem:[%s1 + $0x18] sm:$0xff]
      %v306 = vld [vmem:[%s1 + $0x20] sm:$0xff]
      %v307 = vld [vmem:[%s1 + $0x28] sm:$0xff]
      %v308 = vld [vmem:[%s1 + $0x30] sm:$0xff]
      %v309 = vld [vmem:[%s1 + $0x38] sm:$0xff]
      %v310 = vld [vmem:[%s1 + $0x40] sm:$0xff]
      %v311 = vld [vmem:[%s1 + $0x48] sm:$0xff]
      %v312 = vld [vmem:[%s1 + $0x50] sm:$0xff]
      %v313 = vld [vmem:[%s1 + $0x58] sm:$0xff]
      %v314 = vld [vmem:[%s1 + $0x60] sm:$0xff]
      %v315 = vld [vmem:[%s1 + $0x68] sm:$0xff]
      %v316 = vld [vmem:[%s1 + $0x70] sm:$0xff]
      %v317 = vld [vmem:[%s1 + $0x78] sm:$0xff]
      %v318 = vld [vmem:[%s296] sm:$0xff]
      %v319 = vld [vmem:[%s2] sm:$0xff]
      %v320 = vld [vmem:[%s2 + $0x8] sm:$0xff]
      %v321 = vld [vmem:[%s2 + $0x10] sm:$0xff]
      %v322 = vld [vmem:[%s2 + $0x18] sm:$0xff]
      %v323 = vld [vmem:[%s2 + $0x20] sm:$0xff]
      %v324 = vld [vmem:[%s2 + $0x28] sm:$0xff]
      %v325 = vld [vmem:[%s2 + $0x30] sm:$0xff]
      %v326 = vld [vmem:[%s2 + $0x38] sm:$0xff]
      %v327 = vld [vmem:[%s2 + $0x40] sm:$0xff]
      %v328 = vld [vmem:[%s2 + $0x48] sm:$0xff]
      %v329 = vld [vmem:[%s2 + $0x50] sm:$0xff]
      %v330 = vld [vmem:[%s2 + $0x58] sm:$0xff]
      %v331 = vld [vmem:[%s2 + $0x60] sm:$0xff]
      %v332 = vld [vmem:[%s2 + $0x68] sm:$0xff]
      %v333 = vld [vmem:[%s2 + $0x70] sm:$0xff]
      %v334 = vld [vmem:[%s2 + $0x78] sm:$0xff]
      %336 = vset.pattern.permute.xlu0 0
      %337 = vperm.xlu0 %336, %v319
      %v338 = vpop.permute.xlu0 %337
      %341 = vset.pattern.permute.xlu0 0
      %342 = vperm.xlu0 %341, %v320
      %v343 = vpop.permute.xlu0 %342
      %346 = vset.pattern.permute.xlu0 0
      %347 = vperm.xlu0 %346, %v321
      %v348 = vpop.permute.xlu0 %347
      %351 = vset.pattern.permute.xlu0 0
      %352 = vperm.xlu0 %351, %v322
      %v353 = vpop.permute.xlu0 %352
      %356 = vset.pattern.permute.xlu0 0
      %357 = vperm.xlu0 %356, %v323
      %v358 = vpop.permute.xlu0 %357
      %361 = vset.pattern.permute.xlu0 0
      %362 = vperm.xlu0 %361, %v324
      %v363 = vpop.permute.xlu0 %362
      %366 = vset.pattern.permute.xlu0 0
      %367 = vperm.xlu0 %366, %v325
      %v368 = vpop.permute.xlu0 %367
      %371 = vset.pattern.permute.xlu0 0
      %372 = vperm.xlu0 %371, %v326
      %v373 = vpop.permute.xlu0 %372
      %376 = vset.pattern.permute.xlu0 0
      %377 = vperm.xlu0 %376, %v327
      %v378 = vpop.permute.xlu0 %377
      %381 = vset.pattern.permute.xlu0 0
      %382 = vperm.xlu0 %381, %v328
      %v383 = vpop.permute.xlu0 %382
      %386 = vset.pattern.permute.xlu0 0
      %387 = vperm.xlu0 %386, %v329
      %v388 = vpop.permute.xlu0 %387
      %391 = vset.pattern.permute.xlu0 0
      %392 = vperm.xlu0 %391, %v330
      %v393 = vpop.permute.xlu0 %392
      %396 = vset.pattern.permute.xlu0 0
      %397 = vperm.xlu0 %396, %v331
      %v398 = vpop.permute.xlu0 %397
      %401 = vset.pattern.permute.xlu0 0
      %402 = vperm.xlu0 %401, %v332
      %v403 = vpop.permute.xlu0 %402
      %406 = vset.pattern.permute.xlu0 0
      %407 = vperm.xlu0 %406, %v333
      %v408 = vpop.permute.xlu0 %407
      %411 = vset.pattern.permute.xlu0 0
      %412 = vperm.xlu0 %411, %v334
      %v413 = vpop.permute.xlu0 %412
      %vm415 = vcmask 64512
      %v417 = vsel %vm415, %v302, 0
      %v420 = vsel %vm415, %v303, 0
      %v423 = vsel %vm415, %v304, 0
      %v426 = vsel %vm415, %v305, 0
      %v429 = vsel %vm415, %v306, 0
      %v432 = vsel %vm415, %v307, 0
      %v435 = vsel %vm415, %v308, 0
      %v438 = vsel %vm415, %v309, 0
      %v441 = vsel %vm415, %v310, 0
      %v444 = vsel %vm415, %v311, 0
      %v447 = vsel %vm415, %v312, 0
      %v450 = vsel %vm415, %v313, 0
      %v453 = vsel %vm415, %v314, 0
      %v456 = vsel %vm415, %v315, 0
      %v459 = vsel %vm415, %v316, 0
      %v462 = vsel %vm415, %v317, 0
      %464 = vmatprep.subr.mxu0 0.0
      %465 = vmatpush1.msra.mxu0 %v318
      %466 = vmatprep.subr.mxu0 0.0
      %467 = vmatpush1.msra.mxu0 0.0
      %468 = vmatprep.subr.mxu0 0.0
      %469 = vmatpush1.msra.mxu0 0.0
      %470 = vmatprep.subr.mxu0 0.0
      %471 = vmatpush1.msra.mxu0 0.0
      %472 = vmatprep.subr.mxu0 0.0
      %473 = vmatpush1.msra.mxu0 0.0
      %474 = vmatprep.subr.mxu0 0.0
      %475 = vmatpush1.msra.mxu0 0.0
      %476 = vmatprep.subr.mxu0 0.0
      %477 = vmatpush1.msra.mxu0 0.0
      %478 = vmatprep.subr.mxu0 0.0
      %479 = vmatpush1.msra.mxu0 0.0
      %480 = vmatprep.subr.mxu0 0.0
      %481 = vmatpush1.msra.mxu0 0.0
      %482 = vmatprep.subr.mxu0 0.0
      %483 = vmatpush1.msra.mxu0 0.0
      %484 = vmatprep.subr.mxu0 0.0
      %485 = vmatpush1.msra.mxu0 0.0
      %486 = vmatprep.subr.mxu0 0.0
      %487 = vmatpush1.msra.mxu0 0.0
      %488 = vmatprep.subr.mxu0 0.0
      %489 = vmatpush1.msra.mxu0 0.0
      %490 = vmatprep.subr.mxu0 0.0
      %491 = vmatpush1.msra.mxu0 0.0
      %492 = vmatprep.subr.mxu0 0.0
      %493 = vmatpush1.msra.mxu0 0.0
      %494 = vmatprep.subr.mxu0 0.0
      %495 = vmatpush1.msra.mxu0 0.0
      %496 = vmatprep.subr.mxu0 0.0
      %497 = vmatpush1.msra.mxu0 0.0
      %498 = vmatprep.subr.mxu0 0.0
      %499 = vmatpush1.msra.mxu0 0.0
      %500 = vmatprep.subr.mxu0 0.0
      %501 = vmatpush1.msra.mxu0 0.0
      %502 = vmatprep.subr.mxu0 0.0
      %503 = vmatpush1.msra.mxu0 0.0
      %504 = vmatprep.subr.mxu0 0.0
      %505 = vmatpush1.msra.mxu0 0.0
      %506 = vmatprep.subr.mxu0 0.0
      %507 = vmatpush1.msra.mxu0 0.0
      %508 = vmatprep.subr.mxu0 0.0
      %509 = vmatpush1.msra.mxu0 0.0
      %510 = vmatprep.subr.mxu0 0.0
      %511 = vmatpush1.msra.mxu0 0.0
      %512 = vmatprep.subr.mxu0 0.0
      %513 = vmatpush1.msra.mxu0 0.0
      %514 = vmatprep.subr.mxu0 0.0
      %515 = vmatpush1.msra.mxu0 0.0
      %516 = vmatprep.subr.mxu0 0.0
      %517 = vmatpush1.msra.mxu0 0.0
      %518 = vmatprep.subr.mxu0 0.0
      %519 = vmatpush1.msra.mxu0 0.0
      %520 = vmatprep.subr.mxu0 0.0
      %521 = vmatpush1.msra.mxu0 0.0
      %522 = vmatprep.subr.mxu0 0.0
      %523 = vmatpush1.msra.mxu0 0.0
      %524 = vmatprep.subr.mxu0 0.0
      %525 = vmatpush1.msra.mxu0 0.0
      %526 = vmatprep.subr.mxu0 0.0
      %527 = vmatpush1.msra.mxu0 0.0
      %528 = vmatprep.mubr.f32.mxu0 0.0
      %529 = vmatmul.mubr.f32.gmra.mrb[0].mxu0 %v417
      %v530 = vpop.f32.mrb[0].mxu0
      %v531 = vadd.f32 %v338, %v530
      %v532 = vpop.f32.mrb[0].mxu0
      %533 = vmatprep.mubr.f32.mxu0 0.0
      %534 = vmatmul.mubr.f32.gmra.mrb[0].mxu0 %v420
      %v535 = vpop.f32.mrb[0].mxu0
      %v536 = vadd.f32 %v343, %v535
      %v537 = vpop.f32.mrb[0].mxu0
      %538 = vmatprep.mubr.f32.mxu0 0.0
      %539 = vmatmul.mubr.f32.gmra.mrb[0].mxu0 %v423
      %v540 = vpop.f32.mrb[0].mxu0
      %v541 = vadd.f32 %v348, %v540
      %v542 = vpop.f32.mrb[0].mxu0
      %543 = vmatprep.mubr.f32.mxu0 0.0
      %544 = vmatmul.mubr.f32.gmra.mrb[0].mxu0 %v426
      %v545 = vpop.f32.mrb[0].mxu0
      %v546 = vadd.f32 %v353, %v545
      %v547 = vpop.f32.mrb[0].mxu0
      %548 = vmatprep.mubr.f32.mxu0 0.0
      %549 = vmatmul.mubr.f32.gmra.mrb[0].mxu0 %v429
      %v550 = vpop.f32.mrb[0].mxu0
      %v551 = vadd.f32 %v358, %v550
      %v552 = vpop.f32.mrb[0].mxu0
      %553 = vmatprep.mubr.f32.mxu0 0.0
      %554 = vmatmul.mubr.f32.gmra.mrb[0].mxu0 %v432
      %v555 = vpop.f32.mrb[0].mxu0
      %v556 = vadd.f32 %v363, %v555
      %v557 = vpop.f32.mrb[0].mxu0
      %558 = vmatprep.mubr.f32.mxu0 0.0
      %559 = vmatmul.mubr.f32.gmra.mrb[0].mxu0 %v435
      %v560 = vpop.f32.mrb[0].mxu0
      %v561 = vadd.f32 %v368, %v560
      %v562 = vpop.f32.mrb[0].mxu0
      %563 = vmatprep.mubr.f32.mxu0 0.0
      %564 = vmatmul.mubr.f32.gmra.mrb[0].mxu0 %v438
      %v565 = vpop.f32.mrb[0].mxu0
      %v566 = vadd.f32 %v373, %v565
      %v567 = vpop.f32.mrb[0].mxu0
      %568 = vmatprep.mubr.f32.mxu0 0.0
      %569 = vmatmul.mubr.f32.gmra.mrb[0].mxu0 %v441
      %v570 = vpop.f32.mrb[0].mxu0
      %v571 = vadd.f32 %v378, %v570
      %v572 = vpop.f32.mrb[0].mxu0
      %573 = vmatprep.mubr.f32.mxu0 0.0
      %574 = vmatmul.mubr.f32.gmra.mrb[0].mxu0 %v444
      %v575 = vpop.f32.mrb[0].mxu0
      %v576 = vadd.f32 %v383, %v575
      %v577 = vpop.f32.mrb[0].mxu0
      %578 = vmatprep.mubr.f32.mxu0 0.0
      %579 = vmatmul.mubr.f32.gmra.mrb[0].mxu0 %v447
      %v580 = vpop.f32.mrb[0].mxu0
      %v581 = vadd.f32 %v388, %v580
      %v582 = vpop.f32.mrb[0].mxu0
      %583 = vmatprep.mubr.f32.mxu0 0.0
      %584 = vmatmul.mubr.f32.gmra.mrb[0].mxu0 %v450
      %v585 = vpop.f32.mrb[0].mxu0
      %v586 = vadd.f32 %v393, %v585
      %v587 = vpop.f32.mrb[0].mxu0
      %588 = vmatprep.mubr.f32.mxu0 0.0
      %589 = vmatmul.mubr.f32.gmra.mrb[0].mxu0 %v453
      %v590 = vpop.f32.mrb[0].mxu0
      %v591 = vadd.f32 %v398, %v590
      %v592 = vpop.f32.mrb[0].mxu0
      %593 = vmatprep.mubr.f32.mxu0 0.0
      %594 = vmatmul.mubr.f32.gmra.mrb[0].mxu0 %v456
      %v595 = vpop.f32.mrb[0].mxu0
      %v596 = vadd.f32 %v403, %v595
      %v597 = vpop.f32.mrb[0].mxu0
      %598 = vmatprep.mubr.f32.mxu0 0.0
      %599 = vmatmul.mubr.f32.gmra.mrb[0].mxu0 %v459
      %v600 = vpop.f32.mrb[0].mxu0
      %v601 = vadd.f32 %v408, %v600
      %v602 = vpop.f32.mrb[0].mxu0
      %603 = vmatprep.mubr.f32.mxu0 0.0
      %604 = vmatmul.mubr.f32.gmra.mrb[0].mxu0 %v462
      %v605 = vpop.f32.mrb[0].mxu0
      %v606 = vadd.f32 %v413, %v605
      %v607 = vpop.f32.mrb[0].mxu0
      %608 = vdwg.mxu0
      %v609 = vmax.f32 %v531, 0.0
      %v610 = vmax.f32 %v536, 0.0
      %v611 = vmax.f32 %v541, 0.0
      %v612 = vmax.f32 %v546, 0.0
      %v613 = vmax.f32 %v551, 0.0
      %v614 = vmax.f32 %v556, 0.0
      %v615 = vmax.f32 %v561, 0.0
      %v616 = vmax.f32 %v566, 0.0
      %v617 = vmax.f32 %v571, 0.0
      %v618 = vmax.f32 %v576, 0.0
      %v619 = vmax.f32 %v581, 0.0
      %v620 = vmax.f32 %v586, 0.0
      %v621 = vmax.f32 %v591, 0.0
      %v622 = vmax.f32 %v596, 0.0
      %v623 = vmax.f32 %v601, 0.0
      %v624 = vmax.f32 %v606, 0.0
      %v625 = vld [vmem:[%s3] sm:$0xf]
      %v626 = vld [vmem:[%s3 + $0x4] sm:$0xf]
      %v627 = vld [vmem:[%s3 + $0x8] sm:$0xf]
      %v628 = vld [vmem:[%s3 + $0xc] sm:$0xf]
      %v629 = vld [vmem:[%s3 + $0x10] sm:$0xf]
      %v630 = vld [vmem:[%s3 + $0x14] sm:$0xf]
      %v631 = vld [vmem:[%s3 + $0x18] sm:$0xf]
      %v632 = vld [vmem:[%s3 + $0x1c] sm:$0xf]
      %v633 = vld [vmem:[%s3 + $0x20] sm:$0xf]
      %v634 = vld [vmem:[%s3 + $0x24] sm:$0xf]
      %v635 = vld [vmem:[%s3 + $0x28] sm:$0xf]
      %v636 = vld [vmem:[%s3 + $0x2c] sm:$0xf]
      %v637 = vld [vmem:[%s3 + $0x30] sm:$0xf]
      %v638 = vld [vmem:[%s3 + $0x34] sm:$0xf]
      %v639 = vld [vmem:[%s3 + $0x38] sm:$0xf]
      %v640 = vld [vmem:[%s3 + $0x3c] sm:$0xf]
      %v641 = vpack.c.bf16 %v610, %v609
      %v642 = vpack.c.bf16 %v612, %v611
      %v643 = vpack.c.bf16 %v614, %v613
      %v644 = vpack.c.bf16 %v616, %v615
      %v645 = vpack.c.bf16 %v618, %v617
      %v646 = vpack.c.bf16 %v620, %v619
      %v647 = vpack.c.bf16 %v622, %v621
      %v648 = vpack.c.bf16 %v624, %v623
      %v665 = vunpack.c.l.b16 %v625
      %v666 = vunpack.c.l.b16 %v626
      %v667 = vunpack.c.l.b16 %v627
      %v668 = vunpack.c.l.b16 %v628
      %v669 = vunpack.c.l.b16 %v629
      %v670 = vunpack.c.l.b16 %v630
      %v671 = vunpack.c.l.b16 %v631
      %v672 = vunpack.c.l.b16 %v632
      %v673 = vunpack.c.l.b16 %v633
      %v674 = vunpack.c.l.b16 %v634
      %v675 = vunpack.c.l.b16 %v635
      %v676 = vunpack.c.l.b16 %v636
      %v677 = vunpack.c.l.b16 %v637
      %v678 = vunpack.c.l.b16 %v638
      %v679 = vunpack.c.l.b16 %v639
      %v680 = vunpack.c.l.b16 %v640
      %v681 = vpack.c.b16 %v666, %v665
      %v682 = vpack.c.b16 %v668, %v667
      %v683 = vpack.c.b16 %v670, %v669
      %v684 = vpack.c.b16 %v672, %v671
      %v685 = vpack.c.b16 %v674, %v673
      %v686 = vpack.c.b16 %v676, %v675
      %v687 = vpack.c.b16 %v678, %v677
      %v688 = vpack.c.b16 %v680, %v679
      %697 = vmatprep.subr.bf16.mxu0 0
      %698 = vmatpush1.bf16.msra.mxu0 %v641
      %699 = vmatprep.subr.bf16.mxu0 0
      %700 = vmatpush1.bf16.msra.mxu0 %v642
      %701 = vmatprep.subr.bf16.mxu0 0
      %702 = vmatpush1.bf16.msra.mxu0 %v643
      %703 = vmatprep.subr.bf16.mxu0 0
      %704 = vmatpush1.bf16.msra.mxu0 %v644
      %705 = vmatprep.subr.bf16.mxu0 0
      %706 = vmatpush1.bf16.msra.mxu0 %v645
      %707 = vmatprep.subr.bf16.mxu0 0
      %708 = vmatpush1.bf16.msra.mxu0 %v646
      %709 = vmatprep.subr.bf16.mxu0 0
      %710 = vmatpush1.bf16.msra.mxu0 %v647
      %711 = vmatprep.subr.bf16.mxu0 0
      %712 = vmatpush1.bf16.msra.mxu0 %v648
      %713 = vmatprep.subr.bf16.mxu0 0
      %714 = vmatpush1.bf16.msra.mxu0 0
      %715 = vmatprep.subr.bf16.mxu0 0
      %716 = vmatpush1.bf16.msra.mxu0 0
      %717 = vmatprep.subr.bf16.mxu0 0
      %718 = vmatpush1.bf16.msra.mxu0 0
      %719 = vmatprep.subr.bf16.mxu0 0
      %720 = vmatpush1.bf16.msra.mxu0 0
      %721 = vmatprep.subr.bf16.mxu0 0
      %722 = vmatpush1.bf16.msra.mxu0 0
      %723 = vmatprep.subr.bf16.mxu0 0
      %724 = vmatpush1.bf16.msra.mxu0 0
      %725 = vmatprep.subr.bf16.mxu0 0
      %726 = vmatpush1.bf16.msra.mxu0 0
      %727 = vmatprep.subr.bf16.mxu0 0
      %728 = vmatpush1.bf16.msra.mxu0 0
      %729 = vmatprep.mubr.bf16.mxu0 0
      %730 = vmatmul.mubr.bf16.gmra.mrb[0].mxu0 %v681
      %v731 = vpop.f32.mrb[0].mxu0
      %v732 = vadd.f32 0.0, %v731
      %v733 = vpop.f32.mrb[0].mxu0
      %v734 = vpop.f32.mrb[0].mxu0
      %v735 = vadd.f32 0.0, %v734
      %v736 = vpop.f32.mrb[0].mxu0
      %737 = vmatprep.mubr.bf16.mxu0 0
      %738 = vmatmul.mubr.bf16.gmra.mrb[0].mxu0 %v682
      %v739 = vpop.f32.mrb[0].mxu0
      %v740 = vadd.f32 0.0, %v739
      %v741 = vpop.f32.mrb[0].mxu0
      %v742 = vpop.f32.mrb[0].mxu0
      %v743 = vadd.f32 0.0, %v742
      %v744 = vpop.f32.mrb[0].mxu0
      %745 = vmatprep.mubr.bf16.mxu0 0
      %746 = vmatmul.mubr.bf16.gmra.mrb[0].mxu0 %v683
      %v747 = vpop.f32.mrb[0].mxu0
      %v748 = vadd.f32 0.0, %v747
      %v749 = vpop.f32.mrb[0].mxu0
      %v750 = vpop.f32.mrb[0].mxu0
      %v751 = vadd.f32 0.0, %v750
      %v752 = vpop.f32.mrb[0].mxu0
      %753 = vmatprep.mubr.bf16.mxu0 0
      %754 = vmatmul.mubr.bf16.gmra.mrb[0].mxu0 %v684
      %v755 = vpop.f32.mrb[0].mxu0
      %v756 = vadd.f32 0.0, %v755
      %v757 = vpop.f32.mrb[0].mxu0
      %v758 = vpop.f32.mrb[0].mxu0
      %v759 = vadd.f32 0.0, %v758
      %v760 = vpop.f32.mrb[0].mxu0
      %761 = vmatprep.mubr.bf16.mxu0 0
      %762 = vmatmul.mubr.bf16.gmra.mrb[0].mxu0 %v685
      %v763 = vpop.f32.mrb[0].mxu0
      %v764 = vadd.f32 0.0, %v763
      %v765 = vpop.f32.mrb[0].mxu0
      %v766 = vpop.f32.mrb[0].mxu0
      %v767 = vadd.f32 0.0, %v766
      %v768 = vpop.f32.mrb[0].mxu0
      %769 = vmatprep.mubr.bf16.mxu0 0
      %770 = vmatmul.mubr.bf16.gmra.mrb[0].mxu0 %v686
      %v771 = vpop.f32.mrb[0].mxu0
      %v772 = vadd.f32 0.0, %v771
      %v773 = vpop.f32.mrb[0].mxu0
      %v774 = vpop.f32.mrb[0].mxu0
      %v775 = vadd.f32 0.0, %v774
      %v776 = vpop.f32.mrb[0].mxu0
      %777 = vmatprep.mubr.bf16.mxu0 0
      %778 = vmatmul.mubr.bf16.gmra.mrb[0].mxu0 %v687
      %v779 = vpop.f32.mrb[0].mxu0
      %v780 = vadd.f32 0.0, %v779
      %v781 = vpop.f32.mrb[0].mxu0
      %v782 = vpop.f32.mrb[0].mxu0
      %v783 = vadd.f32 0.0, %v782
      %v784 = vpop.f32.mrb[0].mxu0
      %785 = vmatprep.mubr.bf16.mxu0 0
      %786 = vmatmul.mubr.bf16.gmra.mrb[0].mxu0 %v688
      %v787 = vpop.f32.mrb[0].mxu0
      %v788 = vadd.f32 0.0, %v787
      %v789 = vpop.f32.mrb[0].mxu0
      %v790 = vpop.f32.mrb[0].mxu0
      %v791 = vadd.f32 0.0, %v790
      %v792 = vpop.f32.mrb[0].mxu0
      %793 = vdwg.mxu0
      %v794 = vld [vmem:[%s4] sm:$0xff]
      %v795 = vld [vmem:[%s4 + $0x8] sm:$0xff]
      %v796 = vld [vmem:[%s4 + $0x10] sm:$0xff]
      %v797 = vld [vmem:[%s4 + $0x18] sm:$0xff]
      %v798 = vld [vmem:[%s4 + $0x20] sm:$0xff]
      %v799 = vld [vmem:[%s4 + $0x28] sm:$0xff]
      %v800 = vld [vmem:[%s4 + $0x30] sm:$0xff]
      %v801 = vld [vmem:[%s4 + $0x38] sm:$0xff]
      %v802 = vld [vmem:[%s4 + $0x40] sm:$0xff]
      %v803 = vld [vmem:[%s4 + $0x48] sm:$0xff]
      %v804 = vld [vmem:[%s4 + $0x50] sm:$0xff]
      %v805 = vld [vmem:[%s4 + $0x58] sm:$0xff]
      %v806 = vld [vmem:[%s4 + $0x60] sm:$0xff]
      %v807 = vld [vmem:[%s4 + $0x68] sm:$0xff]
      %v808 = vld [vmem:[%s4 + $0x70] sm:$0xff]
      %v809 = vld [vmem:[%s4 + $0x78] sm:$0xff]
      %811 = vset.pattern.permute.xlu0 0
      %812 = vperm.xlu0 %811, %v794
      %v813 = vpop.permute.xlu0 %812
      %816 = vset.pattern.permute.xlu0 0
      %817 = vperm.xlu0 %816, %v795
      %v818 = vpop.permute.xlu0 %817
      %821 = vset.pattern.permute.xlu0 0
      %822 = vperm.xlu0 %821, %v796
      %v823 = vpop.permute.xlu0 %822
      %826 = vset.pattern.permute.xlu0 0
      %827 = vperm.xlu0 %826, %v797
      %v828 = vpop.permute.xlu0 %827
      %831 = vset.pattern.permute.xlu0 0
      %832 = vperm.xlu0 %831, %v798
      %v833 = vpop.permute.xlu0 %832
      %836 = vset.pattern.permute.xlu0 0
      %837 = vperm.xlu0 %836, %v799
      %v838 = vpop.permute.xlu0 %837
      %841 = vset.pattern.permute.xlu0 0
      %842 = vperm.xlu0 %841, %v800
      %v843 = vpop.permute.xlu0 %842
      %846 = vset.pattern.permute.xlu0 0
      %847 = vperm.xlu0 %846, %v801
      %v848 = vpop.permute.xlu0 %847
      %851 = vset.pattern.permute.xlu0 0
      %852 = vperm.xlu0 %851, %v802
      %v853 = vpop.permute.xlu0 %852
      %856 = vset.pattern.permute.xlu0 0
      %857 = vperm.xlu0 %856, %v803
      %v858 = vpop.permute.xlu0 %857
      %861 = vset.pattern.permute.xlu0 0
      %862 = vperm.xlu0 %861, %v804
      %v863 = vpop.permute.xlu0 %862
      %866 = vset.pattern.permute.xlu0 0
      %867 = vperm.xlu0 %866, %v805
      %v868 = vpop.permute.xlu0 %867
      %871 = vset.pattern.permute.xlu0 0
      %872 = vperm.xlu0 %871, %v806
      %v873 = vpop.permute.xlu0 %872
      %876 = vset.pattern.permute.xlu0 0
      %877 = vperm.xlu0 %876, %v807
      %v878 = vpop.permute.xlu0 %877
      %881 = vset.pattern.permute.xlu0 0
      %882 = vperm.xlu0 %881, %v808
      %v883 = vpop.permute.xlu0 %882
      %886 = vset.pattern.permute.xlu0 0
      %887 = vperm.xlu0 %886, %v809
      %v888 = vpop.permute.xlu0 %887
      %v890 = vmul.f32 %v732, %v813
      %v891 = vmul.f32 %v735, %v818
      %v892 = vmul.f32 %v740, %v823
      %v893 = vmul.f32 %v743, %v828
      %v894 = vmul.f32 %v748, %v833
      %v895 = vmul.f32 %v751, %v838
      %v896 = vmul.f32 %v756, %v843
      %v897 = vmul.f32 %v759, %v848
      %v898 = vmul.f32 %v764, %v853
      %v899 = vmul.f32 %v767, %v858
      %v900 = vmul.f32 %v772, %v863
      %v901 = vmul.f32 %v775, %v868
      %v902 = vmul.f32 %v780, %v873
      %v903 = vmul.f32 %v783, %v878
      %v904 = vmul.f32 %v788, %v883
      %v905 = vmul.f32 %v791, %v888
      %v906 = vld [vmem:[%s5] sm:$0xff]
      %v907 = vld [vmem:[%s5 + $0x8] sm:$0xff]
      %v908 = vld [vmem:[%s5 + $0x10] sm:$0xff]
      %v909 = vld [vmem:[%s5 + $0x18] sm:$0xff]
      %v910 = vld [vmem:[%s5 + $0x20] sm:$0xff]
      %v911 = vld [vmem:[%s5 + $0x28] sm:$0xff]
      %v912 = vld [vmem:[%s5 + $0x30] sm:$0xff]
      %v913 = vld [vmem:[%s5 + $0x38] sm:$0xff]
      %v914 = vld [vmem:[%s5 + $0x40] sm:$0xff]
      %v915 = vld [vmem:[%s5 + $0x48] sm:$0xff]
      %v916 = vld [vmem:[%s5 + $0x50] sm:$0xff]
      %v917 = vld [vmem:[%s5 + $0x58] sm:$0xff]
      %v918 = vld [vmem:[%s5 + $0x60] sm:$0xff]
      %v919 = vld [vmem:[%s5 + $0x68] sm:$0xff]
      %v920 = vld [vmem:[%s5 + $0x70] sm:$0xff]
      %v921 = vld [vmem:[%s5 + $0x78] sm:$0xff]
      %923 = vset.pattern.permute.xlu0 0
      %924 = vperm.xlu0 %923, %v906
      %v925 = vpop.permute.xlu0 %924
      %928 = vset.pattern.permute.xlu0 0
      %929 = vperm.xlu0 %928, %v907
      %v930 = vpop.permute.xlu0 %929
      %933 = vset.pattern.permute.xlu0 0
      %934 = vperm.xlu0 %933, %v908
      %v935 = vpop.permute.xlu0 %934
      %938 = vset.pattern.permute.xlu0 0
      %939 = vperm.xlu0 %938, %v909
      %v940 = vpop.permute.xlu0 %939
      %943 = vset.pattern.permute.xlu0 0
      %944 = vperm.xlu0 %943, %v910
      %v945 = vpop.permute.xlu0 %944
      %948 = vset.pattern.permute.xlu0 0
      %949 = vperm.xlu0 %948, %v911
      %v950 = vpop.permute.xlu0 %949
      %953 = vset.pattern.permute.xlu0 0
      %954 = vperm.xlu0 %953, %v912
      %v955 = vpop.permute.xlu0 %954
      %958 = vset.pattern.permute.xlu0 0
      %959 = vperm.xlu0 %958, %v913
      %v960 = vpop.permute.xlu0 %959
      %963 = vset.pattern.permute.xlu0 0
      %964 = vperm.xlu0 %963, %v914
      %v965 = vpop.permute.xlu0 %964
      %968 = vset.pattern.permute.xlu0 0
      %969 = vperm.xlu0 %968, %v915
      %v970 = vpop.permute.xlu0 %969
      %973 = vset.pattern.permute.xlu0 0
      %974 = vperm.xlu0 %973, %v916
      %v975 = vpop.permute.xlu0 %974
      %978 = vset.pattern.permute.xlu0 0
      %979 = vperm.xlu0 %978, %v917
      %v980 = vpop.permute.xlu0 %979
      %983 = vset.pattern.permute.xlu0 0
      %984 = vperm.xlu0 %983, %v918
      %v985 = vpop.permute.xlu0 %984
      %988 = vset.pattern.permute.xlu0 0
      %989 = vperm.xlu0 %988, %v919
      %v990 = vpop.permute.xlu0 %989
      %993 = vset.pattern.permute.xlu0 0
      %994 = vperm.xlu0 %993, %v920
      %v995 = vpop.permute.xlu0 %994
      %998 = vset.pattern.permute.xlu0 0
      %999 = vperm.xlu0 %998, %v921
      %v1000 = vpop.permute.xlu0 %999
      %v1002 = vadd.f32 %v890, %v925
      %v1003 = vadd.f32 %v891, %v930
      %v1004 = vadd.f32 %v892, %v935
      %v1005 = vadd.f32 %v893, %v940
      %v1006 = vadd.f32 %v894, %v945
      %v1007 = vadd.f32 %v895, %v950
      %v1008 = vadd.f32 %v896, %v955
      %v1009 = vadd.f32 %v897, %v960
      %v1010 = vadd.f32 %v898, %v965
      %v1011 = vadd.f32 %v899, %v970
      %v1012 = vadd.f32 %v900, %v975
      %v1013 = vadd.f32 %v901, %v980
      %v1014 = vadd.f32 %v902, %v985
      %v1015 = vadd.f32 %v903, %v990
      %v1016 = vadd.f32 %v904, %v995
      %v1017 = vadd.f32 %v905, %v1000
      %v1018 = vmax.f32 %v1002, 0.0
      %v1019 = vmax.f32 %v1003, 0.0
      %v1020 = vmax.f32 %v1004, 0.0
      %v1021 = vmax.f32 %v1005, 0.0
      %v1022 = vmax.f32 %v1006, 0.0
      %v1023 = vmax.f32 %v1007, 0.0
      %v1024 = vmax.f32 %v1008, 0.0
      %v1025 = vmax.f32 %v1009, 0.0
      %v1026 = vmax.f32 %v1010, 0.0
      %v1027 = vmax.f32 %v1011, 0.0
      %v1028 = vmax.f32 %v1012, 0.0
      %v1029 = vmax.f32 %v1013, 0.0
      %v1030 = vmax.f32 %v1014, 0.0
      %v1031 = vmax.f32 %v1015, 0.0
      %v1032 = vmax.f32 %v1016, 0.0
      %v1033 = vmax.f32 %v1017, 0.0
      %v1034 = vld [vmem:[%s6] sm:$0xf]
      %v1035 = vpack.c.bf16 %v1019, %v1018
      %v1036 = vpack.c.bf16 %v1021, %v1020
      %v1037 = vpack.c.bf16 %v1023, %v1022
      %v1038 = vpack.c.bf16 %v1025, %v1024
      %v1039 = vpack.c.bf16 %v1027, %v1026
      %v1040 = vpack.c.bf16 %v1029, %v1028
      %v1041 = vpack.c.bf16 %v1031, %v1030
      %v1042 = vpack.c.bf16 %v1033, %v1032
      %v1043 = vld [vmem:[%s7] sm:$0xff]
      %1045 = vset.pattern.permute.xlu0 0
      %1046 = vperm.xlu0 %1045, %v1043
      %v1047 = vpop.permute.xlu0 %1046
      %1049 = vmatprep.subr.bf16.mxu0 0
      %1050 = vmatpush1.bf16.msra.mxu0 %v1035
      %1051 = vmatprep.subr.bf16.mxu0 0
      %1052 = vmatpush1.bf16.msra.mxu0 %v1036
      %1053 = vmatprep.subr.bf16.mxu0 0
      %1054 = vmatpush1.bf16.msra.mxu0 %v1037
      %1055 = vmatprep.subr.bf16.mxu0 0
      %1056 = vmatpush1.bf16.msra.mxu0 %v1038
      %1057 = vmatprep.subr.bf16.mxu0 0
      %1058 = vmatpush1.bf16.msra.mxu0 %v1039
      %1059 = vmatprep.subr.bf16.mxu0 0
      %1060 = vmatpush1.bf16.msra.mxu0 %v1040
      %1061 = vmatprep.subr.bf16.mxu0 0
      %1062 = vmatpush1.bf16.msra.mxu0 %v1041
      %1063 = vmatprep.subr.bf16.mxu0 0
      %1064 = vmatpush1.bf16.msra.mxu0 %v1042
      %1065 = vmatprep.subr.bf16.mxu0 0
      %1066 = vmatpush1.bf16.msra.mxu0 0
      %1067 = vmatprep.subr.bf16.mxu0 0
      %1068 = vmatpush1.bf16.msra.mxu0 0
      %1069 = vmatprep.subr.bf16.mxu0 0
      %1070 = vmatpush1.bf16.msra.mxu0 0
      %1071 = vmatprep.subr.bf16.mxu0 0
      %1072 = vmatpush1.bf16.msra.mxu0 0
      %1073 = vmatprep.subr.bf16.mxu0 0
      %1074 = vmatpush1.bf16.msra.mxu0 0
      %1075 = vmatprep.subr.bf16.mxu0 0
      %1076 = vmatpush1.bf16.msra.mxu0 0
      %1077 = vmatprep.subr.bf16.mxu0 0
      %1078 = vmatpush1.bf16.msra.mxu0 0
      %1079 = vmatprep.subr.bf16.mxu0 0
      %1080 = vmatpush1.bf16.msra.mxu0 0
      %1081 = vmatprep.mubr.bf16.mxu0 0
      %1082 = vmatmul.mubr.bf16.gmra.mrb[0].mxu0 %v1034
      %v1083 = vpop.f32.mrb[0].mxu0
      %v1084 = vadd.f32 %v1047, %v1083
      %v1085 = vpop.f32.mrb[0].mxu0
      %v1086 = vpop.f32.mrb[0].mxu0
      %v1087 = vpop.f32.mrb[0].mxu0
      %1088 = vdwg.mxu0
      %v1089 = vtanh.pop %v1084
      %1090 = vst [vmem:[%s300] sm:$0xff] %v1089
      %p1091 = scmp.lt.s32.totalorder %s19, 3
      %s1092 = scalar_select %p1091, %s19, 3
      %s1093 = smul.addr %s1092, 8
      %s1094 = scalar_lea.vmem %s8, %s1093
      // Predicated region
      $region53: #{patch_deformation_mlp.3} parent=51 // pred_check
        %p1095 = pneg %p210
      $region54: #{patch_deformation_mlp.3} parent=51 // pred_check_branch
        %1097 = sbr.rel (%p1095) target = $region56
      $region55: #{patch_deformation_mlp.3} parent=51 // pred_region
        _
      $region56: #{patch_deformation_mlp.3} parent=51 // pred_fallthru
        _
    $region52: #{patch_deformation_mlp.3} parent=5 // pred_fallthru
      _
    %p1098 = scmp.le.s32.totalorder 2, %s14
    // Predicated region
    $region57: #{patch_deformation_mlp.3} parent=5 // pred_check
      %p1099 = pneg %p1098
    $region58: #{patch_deformation_mlp.3} parent=5 // pred_check_branch
      %1101 = sbr.rel (%p1099) target = $region60
    $region59: #{patch_deformation_mlp.3} parent=5 // pred_region
      %s1102 = ssub.s32 %s14, 2
      // Predicated region
      $region61: #{patch_deformation_mlp.3} parent=59 // pred_check
        %p1103 = pneg %p216
      $region62: #{patch_deformation_mlp.3} parent=59 // pred_check_branch
        %1105 = sbr.rel (%p1103) target = $region64
      $region63: #{patch_deformation_mlp.3} parent=59 // pred_region
        %p1106 = scmp.lt.s32.totalorder %s20, 3
        %s1107 = scalar_select %p1106, %s20, 3
        %s1108 = smul.addr %s1107, 8
        %s1109 = scalar_lea.vmem %s8, %s1108
      $region64: #{patch_deformation_mlp.3} parent=59 // pred_fallthru
        _
    $region60: #{patch_deformation_mlp.3} parent=5 // pred_fallthru
      _
  $region6: #{patch_deformation_mlp.3} parent=0 // loop_footer
    %s18 = sadd.s32 1, %s14
  $region7: #{patch_deformation_mlp.3} parent=0 // loop_footer_branch
    %13 = sbr.rel target = $region3
  $region8: #{patch_deformation_mlp.3} parent=0 // loop_exit
    _

// kernel: patch_deformation_mlp.2
$region0: #{patch_deformation_mlp.2}
  #allocation0 [shape = 'u32[]', space=smem, size = 0x4, offset = 0x4, fixed_abs, tag = 'smem constant byte address 0x4 - core index']
  #allocation1 [shape = 'u32[144,128]{1,0:T(1,128)}', space=vmem, size = 0x12000, scoped, tag = 'internal scratch']
  %s0 = inlined_call_operand.vmem [shape: f32[8,512], index: 0, kind: input, shape index: {}]
  %s1 = inlined_call_operand.vmem [shape: f32[128,8], index: 1, kind: input, shape index: {}]
  %s2 = inlined_call_operand.vmem [shape: f32[128,1], index: 2, kind: input, shape index: {}]
  %s3 = inlined_call_operand.vmem [shape: bf16[128,128], index: 3, kind: input, shape index: {}]
  %s4 = inlined_call_operand.vmem [shape: f32[256,1], index: 4, kind: output, shape index: {0}]
  %s5 = inlined_call_operand.vmem [shape: f32[256,1], index: 5, kind: output, shape index: {1}]
  %6 = xla_tuple %s4, %s5
  %s7 = sld [smem:[#allocation0]]
  $region61: #{patch_deformation_mlp.2} parent=0
    _
  %s9 = ssub.s32 1, %s7
  %s10 = scalar_select 0, %s9, %s7
  loop: start=0, step=1, limit=6
  $region2: #{patch_deformation_mlp.2} parent=0 // loop_pre_header
    _
  $region3: #{patch_deformation_mlp.2} parent=0 // loop_header
    %s12 = sphi 0, %s16
    %p13 = scmp.ge.s32.totalorder %s12, 6
    %s19 = sphi 0, %s31
    %s20 = sphi 0, %s27
    %s21 = sphi 0, %s19
    %s22 = sphi 0, %s20
    %s23 = sphi 0, %s21
    %s24 = sphi 0, %s22
    %s38 = sphi 0, %s40
    %s41 = sphi 0, %s38
    %s42 = sphi 0, %s41
    %s58 = sphi 0, %s42
    %s62 = sphi 0, %s62
    %s64 = sphi 0, %s62
    %s65 = sphi 0, %s64
    %s79 = sphi 0, %s65
    %s83 = sphi 0, %s83
    %s85 = sphi 0, %s83
    %s86 = sphi 0, %s85
    %s100 = sphi 0, %s86
    %s104 = sphi 0, %s104
    %s106 = sphi 0, %s104
    %s107 = sphi 0, %s106
    %s121 = sphi 0, %s107
    %s127 = sphi 0, %s129
    %s130 = sphi 0, %s127
    %s131 = sphi 0, %s130
    %s147 = sphi 0, %s131
    %s153 = sphi 0, %s155
    %s156 = sphi 0, %s153
    %s157 = sphi 0, %s156
    %s173 = sphi 0, %s157
  $region4: #{patch_deformation_mlp.2} parent=0 // loop_header_branch
    %15 = sbr.rel (%p13) target = $region8
  $region5: #{patch_deformation_mlp.2} parent=0 // loop_body
    %s17 = ssub.s32 %s12, 1
    %s18 = ssub.s32 %s12, 2
    %s25 = sadd.s32 1, %s20
    %p26 = scmp.ge.s32.totalorder %s25, 2
    %s27 = scalar_select %p26, 0, %s25
    %s28 = sadd.s32 1, %s19
    %s29 = scalar_select %p26, %s28, %s19
    %p30 = scmp.ge.s32.totalorder %s29, 2
    %s31 = scalar_select %p30, 0, %s29
    %s32 = smul.u32 %s19, 2
    %s33 = sadd.s32 %s32, %s20
    %s34 = smul.u32 %s31, 2
    %s35 = sadd.s32 %s34, %s27
    %s36 = ssub.s32 %s33, %s35
    %p37 = scmp.eq.s32.totalorder %s36, 0
    %s39 = sadd.s32 %s38, 1
    %s40 = scalar_select %p37, %s38, %s39
    %p43 = pneg %p37
    %p44 = scmp.eq.s32.totalorder %s12, 3
    %p45 = por %p43, %p44
    %p46 = scmp.ne.s32.totalorder %s38, %s41
    %p47 = scmp.eq.s32.totalorder %s12, 0
    %p48 = por %p46, %p47
    %p49 = scmp.ne.s32.totalorder %s38, %s41
    %p50 = scmp.eq.s32.totalorder %s17, 3
    %p51 = por %p49, %p50
    %p52 = scmp.ne.s32.totalorder %s41, %s42
    %p53 = scmp.eq.s32.totalorder %s17, 0
    %p54 = por %p52, %p53
    %p55 = scmp.ne.s32.totalorder %s41, %s42
    %p56 = scmp.eq.s32.totalorder %s18, 3
    %p57 = por %p55, %p56
    %p59 = scmp.ne.s32.totalorder %s42, %s58
    %p60 = scmp.eq.s32.totalorder %s18, 0
    %p61 = por %p59, %p60
    %s63 = sadd.s32 %s62, 1
    %p66 = scmp.eq.s32.totalorder %s12, 3
    %p67 = scmp.ne.s32.totalorder %s62, %s64
    %p68 = scmp.eq.s32.totalorder %s12, 0
    %p69 = por %p67, %p68
    %p70 = scmp.ne.s32.totalorder %s62, %s64
    %p71 = scmp.eq.s32.totalorder %s17, 3
    %p72 = por %p70, %p71
    %p73 = scmp.ne.s32.totalorder %s64, %s65
    %p74 = scmp.eq.s32.totalorder %s17, 0
    %p75 = por %p73, %p74
    %p76 = scmp.ne.s32.totalorder %s64, %s65
    %p77 = scmp.eq.s32.totalorder %s18, 3
    %p78 = por %p76, %p77
    %p80 = scmp.ne.s32.totalorder %s65, %s79
    %p81 = scmp.eq.s32.totalorder %s18, 0
    %p82 = por %p80, %p81
    %s84 = sadd.s32 %s83, 1
    %p87 = scmp.eq.s32.totalorder %s12, 3
    %p88 = scmp.ne.s32.totalorder %s83, %s85
    %p89 = scmp.eq.s32.totalorder %s12, 0
    %p90 = por %p88, %p89
    %p91 = scmp.ne.s32.totalorder %s83, %s85
    %p92 = scmp.eq.s32.totalorder %s17, 3
    %p93 = por %p91, %p92
    %p94 = scmp.ne.s32.totalorder %s85, %s86
    %p95 = scmp.eq.s32.totalorder %s17, 0
    %p96 = por %p94, %p95
    %p97 = scmp.ne.s32.totalorder %s85, %s86
    %p98 = scmp.eq.s32.totalorder %s18, 3
    %p99 = por %p97, %p98
    %p101 = scmp.ne.s32.totalorder %s86, %s100
    %p102 = scmp.eq.s32.totalorder %s18, 0
    %p103 = por %p101, %p102
    %s105 = sadd.s32 %s104, 1
    %p108 = scmp.eq.s32.totalorder %s12, 3
    %p109 = scmp.ne.s32.totalorder %s104, %s106
    %p110 = scmp.eq.s32.totalorder %s12, 0
    %p111 = por %p109, %p110
    %p112 = scmp.ne.s32.totalorder %s104, %s106
    %p113 = scmp.eq.s32.totalorder %s17, 3
    %p114 = por %p112, %p113
    %p115 = scmp.ne.s32.totalorder %s106, %s107
    %p116 = scmp.eq.s32.totalorder %s17, 0
    %p117 = por %p115, %p116
    %p118 = scmp.ne.s32.totalorder %s106, %s107
    %p119 = scmp.eq.s32.totalorder %s18, 3
    %p120 = por %p118, %p119
    %p122 = scmp.ne.s32.totalorder %s107, %s121
    %p123 = scmp.eq.s32.totalorder %s18, 0
    %p124 = por %p122, %p123
    %s125 = ssub.s32 %s19, %s31
    %p126 = scmp.eq.s32.totalorder %s125, 0
    %s128 = sadd.s32 %s127, 1
    %s129 = scalar_select %p126, %s127, %s128
    %p132 = pneg %p126
    %p133 = scmp.eq.s32.totalorder %s12, 3
    %p134 = por %p132, %p133
    %p135 = scmp.ne.s32.totalorder %s127, %s130
    %p136 = scmp.eq.s32.totalorder %s12, 0
    %p137 = por %p135, %p136
    %p138 = scmp.ne.s32.totalorder %s127, %s130
    %p139 = scmp.eq.s32.totalorder %s17, 3
    %p140 = por %p138, %p139
    %p141 = scmp.ne.s32.totalorder %s130, %s131
    %p142 = scmp.eq.s32.totalorder %s17, 0
    %p143 = por %p141, %p142
    %p144 = scmp.ne.s32.totalorder %s130, %s131
    %p145 = scmp.eq.s32.totalorder %s18, 3
    %p146 = por %p144, %p145
    %p148 = scmp.ne.s32.totalorder %s131, %s147
    %p149 = scmp.eq.s32.totalorder %s18, 0
    %p150 = por %p148, %p149
    %s151 = ssub.s32 %s19, %s31
    %p152 = scmp.eq.s32.totalorder %s151, 0
    %s154 = sadd.s32 %s153, 1
    %s155 = scalar_select %p152, %s153, %s154
    %p158 = pneg %p152
    %p159 = scmp.eq.s32.totalorder %s12, 3
    %p160 = por %p158, %p159
    %p161 = scmp.ne.s32.totalorder %s153, %s156
    %p162 = scmp.eq.s32.totalorder %s12, 0
    %p163 = por %p161, %p162
    %p164 = scmp.ne.s32.totalorder %s153, %s156
    %p165 = scmp.eq.s32.totalorder %s17, 3
    %p166 = por %p164, %p165
    %p167 = scmp.ne.s32.totalorder %s156, %s157
    %p168 = scmp.eq.s32.totalorder %s17, 0
    %p169 = por %p167, %p168
    %p170 = scmp.ne.s32.totalorder %s156, %s157
    %p171 = scmp.eq.s32.totalorder %s18, 3
    %p172 = por %p170, %p171
    %p174 = scmp.ne.s32.totalorder %s157, %s173
    %p175 = scmp.eq.s32.totalorder %s18, 0
    %p176 = por %p174, %p175
    %p177 = scmp.le.s32.totalorder 1, %s12
    %p178 = scmp.lt.s32.totalorder %s12, 5
    %p179 = pnand %p177, %p178
    %p180 = pneg %p179
    // Predicated region
    $region9: #{patch_deformation_mlp.2} parent=5 // pred_check
      _
    $region10: #{patch_deformation_mlp.2} parent=5 // pred_check_branch
      %182 = sbr.rel (%p179) target = $region12
    $region11: #{patch_deformation_mlp.2} parent=5 // pred_region
      %s183 = ssub.s32 %s12, 1
      // Predicated region
      $region13: #{patch_deformation_mlp.2} parent=11 // pred_check
        %p184 = pneg %p75
      $region14: #{patch_deformation_mlp.2} parent=11 // pred_check_branch
        %186 = sbr.rel (%p184) target = $region16
      $region15: #{patch_deformation_mlp.2} parent=11 // pred_region
        _
      $region16: #{patch_deformation_mlp.2} parent=11 // pred_fallthru
        _
      // Predicated region
      $region17: #{patch_deformation_mlp.2} parent=11 // pred_check
        %p187 = pneg %p96
      $region18: #{patch_deformation_mlp.2} parent=11 // pred_check_branch
        %189 = sbr.rel (%p187) target = $region20
      $region19: #{patch_deformation_mlp.2} parent=11 // pred_region
        _
      $region20: #{patch_deformation_mlp.2} parent=11 // pred_fallthru
        _
      // Predicated region
      $region21: #{patch_deformation_mlp.2} parent=11 // pred_check
        %p190 = pneg %p117
      $region22: #{patch_deformation_mlp.2} parent=11 // pred_check_branch
        %192 = sbr.rel (%p190) target = $region24
      $region23: #{patch_deformation_mlp.2} parent=11 // pred_region
        _
      $region24: #{patch_deformation_mlp.2} parent=11 // pred_fallthru
        _
    $region12: #{patch_deformation_mlp.2} parent=5 // pred_fallthru
      _
    %p193 = scmp.lt.s32.totalorder %s12, 4
    // Predicated region
    $region25: #{patch_deformation_mlp.2} parent=5 // pred_check
      %p194 = pneg %p193
    $region26: #{patch_deformation_mlp.2} parent=5 // pred_check_branch
      %196 = sbr.rel (%p194) target = $region28
    $region27: #{patch_deformation_mlp.2} parent=5 // pred_region
      // Predicated region
      $region29: #{patch_deformation_mlp.2} parent=27 // pred_check
        %p197 = pneg %p48
      $region30: #{patch_deformation_mlp.2} parent=27 // pred_check_branch
        %199 = sbr.rel (%p197) target = $region32
      $region31: #{patch_deformation_mlp.2} parent=27 // pred_region
        %s200 = smul.u32 %s19, 2
        %s201 = sadd.s32 %s200, %s20
        %p202 = scmp.lt.s32.totalorder %s201, 3
        %s203 = scalar_select %p202, %s201, 3
        %s204 = smul.addr %s203, 8
        %s205 = scalar_lea.vmem %s0, %s204
        %s206 = smul.u32 %s19, 2
        %s207 = sadd.s32 %s206, %s20
      $region32: #{patch_deformation_mlp.2} parent=27 // pred_fallthru
        _
    $region28: #{patch_deformation_mlp.2} parent=5 // pred_fallthru
      _
    %p208 = scmp.le.s32.totalorder 1, %s12
    %p209 = scmp.lt.s32.totalorder %s12, 5
    %p210 = pnand %p208, %p209
    %p211 = pneg %p210
    // Predicated region
    $region33: #{patch_deformation_mlp.2} parent=5 // pred_check
      _
    $region34: #{patch_deformation_mlp.2} parent=5 // pred_check_branch
      %213 = sbr.rel (%p210) target = $region36
    $region35: #{patch_deformation_mlp.2} parent=5 // pred_region
      %s214 = ssub.s32 %s12, 1
      %s215 = smul.u32 %s21, 2
      %s216 = sadd.s32 %s215, %s22
      %p217 = scmp.lt.s32.totalorder %s216, 3
      %s218 = scalar_select %p217, %s216, 3
      %s219 = smul.addr %s218, 8
      %s220 = scalar_lea.vmem %s0, %s219
      %p221 = pneg %p54
      %p222 = pneg %p51
      %p223 = pneg %p75
      %p224 = pneg %p72
      %p225 = pneg %p96
      %p226 = pneg %p93
      %p227 = pneg %p117
      %p228 = pneg %p114
      %p229 = pneg %p143
      %p230 = pneg %p140
      %s231 = smul.u32 16, %s21
      %p232 = scmp.lt.s32.totalorder %s231, 31
      %s233 = scalar_select %p232, %s231, 31
      %s234 = smul.addr %s233, 8
      %s235 = scalar_lea.vmem %s4, %s234
      %p236 = pneg %p169
      %p237 = pneg %p166
      %s238 = smul.u32 16, %s21
      %p239 = scmp.lt.s32.totalorder %s238, 31
      %s240 = scalar_select %p239, %s238, 31
      %s241 = smul.addr %s240, 8
      %s242 = scalar_lea.vmem %s5, %s241
      %s243 = smul.u32 %s21, 2
      %s244 = sadd.s32 %s243, %s22
      %p245 = scmp.lt.s32.totalorder %s244, 3
      %s246 = scalar_select %p245, %s244, 3
      %s247 = smul.addr %s246, 8
      %s248 = scalar_lea.vmem %s0, %s247
      %s249 = smul.u32 %s21, 2
      %s250 = sadd.s32 %s249, %s22
      %s251 = smul.u32 16, %s21
      %p252 = scmp.lt.s32.totalorder %s251, 31
      %s253 = scalar_select %p252, %s251, 31
      %s254 = smul.addr %s253, 8
      %s255 = scalar_lea.vmem %s4, %s254
      %s256 = smul.u32 16, %s21
      %s257 = smul.u32 16, %s21
      %p258 = scmp.lt.s32.totalorder %s257, 31
      %s259 = scalar_select %p258, %s257, 31
      %s260 = smul.addr %s259, 8
      %s261 = scalar_lea.vmem %s5, %s260
      %s262 = smul.u32 16, %s21
      %p264 = scmp.eq.s32.totalorder %s22, 0
      // Predicated region
      $region37: #{patch_deformation_mlp.2} parent=35 // pred_check
        %p265 = pneg %p264
      $region38: #{patch_deformation_mlp.2} parent=35 // pred_check_branch
        %267 = sbr.rel (%p265) target = $region40
      $region39: #{patch_deformation_mlp.2} parent=35 // pred_region
        %vm268 = vcmask 7168
        %269 = vst.msk [vmem:[%s255] sm:$0xff] %vm268, 0.0
        %270 = vst.msk [vmem:[%s255 + $0x8] sm:$0xff] %vm268, 0.0
        %271 = vst.msk [vmem:[%s255 + $0x10] sm:$0xff] %vm268, 0.0
        %272 = vst.msk [vmem:[%s255 + $0x18] sm:$0xff] %vm268, 0.0
        %273 = vst.msk [vmem:[%s255 + $0x20] sm:$0xff] %vm268, 0.0
        %274 = vst.msk [vmem:[%s255 + $0x28] sm:$0xff] %vm268, 0.0
        %275 = vst.msk [vmem:[%s255 + $0x30] sm:$0xff] %vm268, 0.0
        %276 = vst.msk [vmem:[%s255 + $0x38] sm:$0xff] %vm268, 0.0
        %277 = vst.msk [vmem:[%s255 + $0x40] sm:$0xff] %vm268, 0.0
        %278 = vst.msk [vmem:[%s255 + $0x48] sm:$0xff] %vm268, 0.0
        %279 = vst.msk [vmem:[%s255 + $0x50] sm:$0xff] %vm268, 0.0
        %280 = vst.msk [vmem:[%s255 + $0x58] sm:$0xff] %vm268, 0.0
        %281 = vst.msk [vmem:[%s255 + $0x60] sm:$0xff] %vm268, 0.0
        %282 = vst.msk [vmem:[%s255 + $0x68] sm:$0xff] %vm268, 0.0
        %283 = vst.msk [vmem:[%s255 + $0x70] sm:$0xff] %vm268, 0.0
        %284 = vst.msk [vmem:[%s255 + $0x78] sm:$0xff] %vm268, 0.0
        %285 = vst.msk [vmem:[%s261] sm:$0xff] %vm268, 0.0
        %286 = vst.msk [vmem:[%s261 + $0x8] sm:$0xff] %vm268, 0.0
        %287 = vst.msk [vmem:[%s261 + $0x10] sm:$0xff] %vm268, 0.0
        %288 = vst.msk [vmem:[%s261 + $0x18] sm:$0xff] %vm268, 0.0
        %289 = vst.msk [vmem:[%s261 + $0x20] sm:$0xff] %vm268, 0.0
        %290 = vst.msk [vmem:[%s261 + $0x28] sm:$0xff] %vm268, 0.0
        %291 = vst.msk [vmem:[%s261 + $0x30] sm:$0xff] %vm268, 0.0
        %292 = vst.msk [vmem:[%s261 + $0x38] sm:$0xff] %vm268, 0.0
        %293 = vst.msk [vmem:[%s261 + $0x40] sm:$0xff] %vm268, 0.0
        %294 = vst.msk [vmem:[%s261 + $0x48] sm:$0xff] %vm268, 0.0
        %295 = vst.msk [vmem:[%s261 + $0x50] sm:$0xff] %vm268, 0.0
        %296 = vst.msk [vmem:[%s261 + $0x58] sm:$0xff] %vm268, 0.0
        %297 = vst.msk [vmem:[%s261 + $0x60] sm:$0xff] %vm268, 0.0
        %298 = vst.msk [vmem:[%s261 + $0x68] sm:$0xff] %vm268, 0.0
        %299 = vst.msk [vmem:[%s261 + $0x70] sm:$0xff] %vm268, 0.0
        %300 = vst.msk [vmem:[%s261 + $0x78] sm:$0xff] %vm268, 0.0
      $region40: #{patch_deformation_mlp.2} parent=35 // pred_fallthru
        _
      %v301 = vld [vmem:[%s1] sm:$0xff]
      %v302 = vld [vmem:[%s1 + $0x8] sm:$0xff]
      %v303 = vld [vmem:[%s1 + $0x10] sm:$0xff]
      %v304 = vld [vmem:[%s1 + $0x18] sm:$0xff]
      %v305 = vld [vmem:[%s1 + $0x20] sm:$0xff]
      %v306 = vld [vmem:[%s1 + $0x28] sm:$0xff]
      %v307 = vld [vmem:[%s1 + $0x30] sm:$0xff]
      %v308 = vld [vmem:[%s1 + $0x38] sm:$0xff]
      %v309 = vld [vmem:[%s1 + $0x40] sm:$0xff]
      %v310 = vld [vmem:[%s1 + $0x48] sm:$0xff]
      %v311 = vld [vmem:[%s1 + $0x50] sm:$0xff]
      %v312 = vld [vmem:[%s1 + $0x58] sm:$0xff]
      %v313 = vld [vmem:[%s1 + $0x60] sm:$0xff]
      %v314 = vld [vmem:[%s1 + $0x68] sm:$0xff]
      %v315 = vld [vmem:[%s1 + $0x70] sm:$0xff]
      %v316 = vld [vmem:[%s1 + $0x78] sm:$0xff]
      %v317 = vld [vmem:[%s248] sm:$0xff]
      %v318 = vld [vmem:[%s2] sm:$0xff]
      %v319 = vld [vmem:[%s2 + $0x8] sm:$0xff]
      %v320 = vld [vmem:[%s2 + $0x10] sm:$0xff]
      %v321 = vld [vmem:[%s2 + $0x18] sm:$0xff]
      %v322 = vld [vmem:[%s2 + $0x20] sm:$0xff]
      %v323 = vld [vmem:[%s2 + $0x28] sm:$0xff]
      %v324 = vld [vmem:[%s2 + $0x30] sm:$0xff]
      %v325 = vld [vmem:[%s2 + $0x38] sm:$0xff]
      %v326 = vld [vmem:[%s2 + $0x40] sm:$0xff]
      %v327 = vld [vmem:[%s2 + $0x48] sm:$0xff]
      %v328 = vld [vmem:[%s2 + $0x50] sm:$0xff]
      %v329 = vld [vmem:[%s2 + $0x58] sm:$0xff]
      %v330 = vld [vmem:[%s2 + $0x60] sm:$0xff]
      %v331 = vld [vmem:[%s2 + $0x68] sm:$0xff]
      %v332 = vld [vmem:[%s2 + $0x70] sm:$0xff]
      %v333 = vld [vmem:[%s2 + $0x78] sm:$0xff]
      %335 = vset.pattern.permute.xlu0 0
      %336 = vperm.xlu0 %335, %v318
      %v337 = vpop.permute.xlu0 %336
      %340 = vset.pattern.permute.xlu0 0
      %341 = vperm.xlu0 %340, %v319
      %v342 = vpop.permute.xlu0 %341
      %345 = vset.pattern.permute.xlu0 0
      %346 = vperm.xlu0 %345, %v320
      %v347 = vpop.permute.xlu0 %346
      %350 = vset.pattern.permute.xlu0 0
      %351 = vperm.xlu0 %350, %v321
      %v352 = vpop.permute.xlu0 %351
      %355 = vset.pattern.permute.xlu0 0
      %356 = vperm.xlu0 %355, %v322
      %v357 = vpop.permute.xlu0 %356
      %360 = vset.pattern.permute.xlu0 0
      %361 = vperm.xlu0 %360, %v323
      %v362 = vpop.permute.xlu0 %361
      %365 = vset.pattern.permute.xlu0 0
      %366 = vperm.xlu0 %365, %v324
      %v367 = vpop.permute.xlu0 %366
      %370 = vset.pattern.permute.xlu0 0
      %371 = vperm.xlu0 %370, %v325
      %v372 = vpop.permute.xlu0 %371
      %375 = vset.pattern.permute.xlu0 0
      %376 = vperm.xlu0 %375, %v326
      %v377 = vpop.permute.xlu0 %376
      %380 = vset.pattern.permute.xlu0 0
      %381 = vperm.xlu0 %380, %v327
      %v382 = vpop.permute.xlu0 %381
      %385 = vset.pattern.permute.xlu0 0
      %386 = vperm.xlu0 %385, %v328
      %v387 = vpop.permute.xlu0 %386
      %390 = vset.pattern.permute.xlu0 0
      %391 = vperm.xlu0 %390, %v329
      %v392 = vpop.permute.xlu0 %391
      %395 = vset.pattern.permute.xlu0 0
      %396 = vperm.xlu0 %395, %v330
      %v397 = vpop.permute.xlu0 %396
      %400 = vset.pattern.permute.xlu0 0
      %401 = vperm.xlu0 %400, %v331
      %v402 = vpop.permute.xlu0 %401
      %405 = vset.pattern.permute.xlu0 0
      %406 = vperm.xlu0 %405, %v332
      %v407 = vpop.permute.xlu0 %406
      %410 = vset.pattern.permute.xlu0 0
      %411 = vperm.xlu0 %410, %v333
      %v412 = vpop.permute.xlu0 %411
      %vm414 = vcmask 64512
      %v416 = vsel %vm414, %v301, 0
      %v419 = vsel %vm414, %v302, 0
      %v422 = vsel %vm414, %v303, 0
      %v425 = vsel %vm414, %v304, 0
      %v428 = vsel %vm414, %v305, 0
      %v431 = vsel %vm414, %v306, 0
      %v434 = vsel %vm414, %v307, 0
      %v437 = vsel %vm414, %v308, 0
      %v440 = vsel %vm414, %v309, 0
      %v443 = vsel %vm414, %v310, 0
      %v446 = vsel %vm414, %v311, 0
      %v449 = vsel %vm414, %v312, 0
      %v452 = vsel %vm414, %v313, 0
      %v455 = vsel %vm414, %v314, 0
      %v458 = vsel %vm414, %v315, 0
      %v461 = vsel %vm414, %v316, 0
      %463 = vmatprep.subr.mxu0 0.0
      %464 = vmatpush1.msra.mxu0 %v317
      %465 = vmatprep.subr.mxu0 0.0
      %466 = vmatpush1.msra.mxu0 0.0
      %467 = vmatprep.subr.mxu0 0.0
      %468 = vmatpush1.msra.mxu0 0.0
      %469 = vmatprep.subr.mxu0 0.0
      %470 = vmatpush1.msra.mxu0 0.0
      %471 = vmatprep.subr.mxu0 0.0
      %472 = vmatpush1.msra.mxu0 0.0
      %473 = vmatprep.subr.mxu0 0.0
      %474 = vmatpush1.msra.mxu0 0.0
      %475 = vmatprep.subr.mxu0 0.0
      %476 = vmatpush1.msra.mxu0 0.0
      %477 = vmatprep.subr.mxu0 0.0
      %478 = vmatpush1.msra.mxu0 0.0
      %479 = vmatprep.subr.mxu0 0.0
      %480 = vmatpush1.msra.mxu0 0.0
      %481 = vmatprep.subr.mxu0 0.0
      %482 = vmatpush1.msra.mxu0 0.0
      %483 = vmatprep.subr.mxu0 0.0
      %484 = vmatpush1.msra.mxu0 0.0
      %485 = vmatprep.subr.mxu0 0.0
      %486 = vmatpush1.msra.mxu0 0.0
      %487 = vmatprep.subr.mxu0 0.0
      %488 = vmatpush1.msra.mxu0 0.0
      %489 = vmatprep.subr.mxu0 0.0
      %490 = vmatpush1.msra.mxu0 0.0
      %491 = vmatprep.subr.mxu0 0.0
      %492 = vmatpush1.msra.mxu0 0.0
      %493 = vmatprep.subr.mxu0 0.0
      %494 = vmatpush1.msra.mxu0 0.0
      %495 = vmatprep.subr.mxu0 0.0
      %496 = vmatpush1.msra.mxu0 0.0
      %497 = vmatprep.subr.mxu0 0.0
      %498 = vmatpush1.msra.mxu0 0.0
      %499 = vmatprep.subr.mxu0 0.0
      %500 = vmatpush1.msra.mxu0 0.0
      %501 = vmatprep.subr.mxu0 0.0
      %502 = vmatpush1.msra.mxu0 0.0
      %503 = vmatprep.subr.mxu0 0.0
      %504 = vmatpush1.msra.mxu0 0.0
      %505 = vmatprep.subr.mxu0 0.0
      %506 = vmatpush1.msra.mxu0 0.0
      %507 = vmatprep.subr.mxu0 0.0
      %508 = vmatpush1.msra.mxu0 0.0
      %509 = vmatprep.subr.mxu0 0.0
      %510 = vmatpush1.msra.mxu0 0.0
      %511 = vmatprep.subr.mxu0 0.0
      %512 = vmatpush1.msra.mxu0 0.0
      %513 = vmatprep.subr.mxu0 0.0
      %514 = vmatpush1.msra.mxu0 0.0
      %515 = vmatprep.subr.mxu0 0.0
      %516 = vmatpush1.msra.mxu0 0.0
      %517 = vmatprep.subr.mxu0 0.0
      %518 = vmatpush1.msra.mxu0 0.0
      %519 = vmatprep.subr.mxu0 0.0
      %520 = vmatpush1.msra.mxu0 0.0
      %521 = vmatprep.subr.mxu0 0.0
      %522 = vmatpush1.msra.mxu0 0.0
      %523 = vmatprep.subr.mxu0 0.0
      %524 = vmatpush1.msra.mxu0 0.0
      %525 = vmatprep.subr.mxu0 0.0
      %526 = vmatpush1.msra.mxu0 0.0
      %527 = vmatprep.mubr.f32.mxu0 0.0
      %528 = vmatmul.mubr.f32.gmra.mrb[0].mxu0 %v416
      %v529 = vpop.f32.mrb[0].mxu0
      %v530 = vadd.f32 %v337, %v529
      %v531 = vpop.f32.mrb[0].mxu0
      %532 = vmatprep.mubr.f32.mxu0 0.0
      %533 = vmatmul.mubr.f32.gmra.mrb[0].mxu0 %v419
      %v534 = vpop.f32.mrb[0].mxu0
      %v535 = vadd.f32 %v342, %v534
      %v536 = vpop.f32.mrb[0].mxu0
      %537 = vmatprep.mubr.f32.mxu0 0.0
      %538 = vmatmul.mubr.f32.gmra.mrb[0].mxu0 %v422
      %v539 = vpop.f32.mrb[0].mxu0
      %v540 = vadd.f32 %v347, %v539
      %v541 = vpop.f32.mrb[0].mxu0
      %542 = vmatprep.mubr.f32.mxu0 0.0
      %543 = vmatmul.mubr.f32.gmra.mrb[0].mxu0 %v425
      %v544 = vpop.f32.mrb[0].mxu0
      %v545 = vadd.f32 %v352, %v544
      %v546 = vpop.f32.mrb[0].mxu0
      %547 = vmatprep.mubr.f32.mxu0 0.0
      %548 = vmatmul.mubr.f32.gmra.mrb[0].mxu0 %v428
      %v549 = vpop.f32.mrb[0].mxu0
      %v550 = vadd.f32 %v357, %v549
      %v551 = vpop.f32.mrb[0].mxu0
      %552 = vmatprep.mubr.f32.mxu0 0.0
      %553 = vmatmul.mubr.f32.gmra.mrb[0].mxu0 %v431
      %v554 = vpop.f32.mrb[0].mxu0
      %v555 = vadd.f32 %v362, %v554
      %v556 = vpop.f32.mrb[0].mxu0
      %557 = vmatprep.mubr.f32.mxu0 0.0
      %558 = vmatmul.mubr.f32.gmra.mrb[0].mxu0 %v434
      %v559 = vpop.f32.mrb[0].mxu0
      %v560 = vadd.f32 %v367, %v559
      %v561 = vpop.f32.mrb[0].mxu0
      %562 = vmatprep.mubr.f32.mxu0 0.0
      %563 = vmatmul.mubr.f32.gmra.mrb[0].mxu0 %v437
      %v564 = vpop.f32.mrb[0].mxu0
      %v565 = vadd.f32 %v372, %v564
      %v566 = vpop.f32.mrb[0].mxu0
      %567 = vmatprep.mubr.f32.mxu0 0.0
      %568 = vmatmul.mubr.f32.gmra.mrb[0].mxu0 %v440
      %v569 = vpop.f32.mrb[0].mxu0
      %v570 = vadd.f32 %v377, %v569
      %v571 = vpop.f32.mrb[0].mxu0
      %572 = vmatprep.mubr.f32.mxu0 0.0
      %573 = vmatmul.mubr.f32.gmra.mrb[0].mxu0 %v443
      %v574 = vpop.f32.mrb[0].mxu0
      %v575 = vadd.f32 %v382, %v574
      %v576 = vpop.f32.mrb[0].mxu0
      %577 = vmatprep.mubr.f32.mxu0 0.0
      %578 = vmatmul.mubr.f32.gmra.mrb[0].mxu0 %v446
      %v579 = vpop.f32.mrb[0].mxu0
      %v580 = vadd.f32 %v387, %v579
      %v581 = vpop.f32.mrb[0].mxu0
      %582 = vmatprep.mubr.f32.mxu0 0.0
      %583 = vmatmul.mubr.f32.gmra.mrb[0].mxu0 %v449
      %v584 = vpop.f32.mrb[0].mxu0
      %v585 = vadd.f32 %v392, %v584
      %v586 = vpop.f32.mrb[0].mxu0
      %587 = vmatprep.mubr.f32.mxu0 0.0
      %588 = vmatmul.mubr.f32.gmra.mrb[0].mxu0 %v452
      %v589 = vpop.f32.mrb[0].mxu0
      %v590 = vadd.f32 %v397, %v589
      %v591 = vpop.f32.mrb[0].mxu0
      %592 = vmatprep.mubr.f32.mxu0 0.0
      %593 = vmatmul.mubr.f32.gmra.mrb[0].mxu0 %v455
      %v594 = vpop.f32.mrb[0].mxu0
      %v595 = vadd.f32 %v402, %v594
      %v596 = vpop.f32.mrb[0].mxu0
      %597 = vmatprep.mubr.f32.mxu0 0.0
      %598 = vmatmul.mubr.f32.gmra.mrb[0].mxu0 %v458
      %v599 = vpop.f32.mrb[0].mxu0
      %v600 = vadd.f32 %v407, %v599
      %v601 = vpop.f32.mrb[0].mxu0
      %602 = vmatprep.mubr.f32.mxu0 0.0
      %603 = vmatmul.mubr.f32.gmra.mrb[0].mxu0 %v461
      %v604 = vpop.f32.mrb[0].mxu0
      %v605 = vadd.f32 %v412, %v604
      %v606 = vpop.f32.mrb[0].mxu0
      %607 = vdwg.mxu0
      %v608 = vmax.f32 %v530, 0.0
      %v609 = vmax.f32 %v535, 0.0
      %v610 = vmax.f32 %v540, 0.0
      %v611 = vmax.f32 %v545, 0.0
      %v612 = vmax.f32 %v550, 0.0
      %v613 = vmax.f32 %v555, 0.0
      %v614 = vmax.f32 %v560, 0.0
      %v615 = vmax.f32 %v565, 0.0
      %v616 = vmax.f32 %v570, 0.0
      %v617 = vmax.f32 %v575, 0.0
      %v618 = vmax.f32 %v580, 0.0
      %v619 = vmax.f32 %v585, 0.0
      %v620 = vmax.f32 %v590, 0.0
      %v621 = vmax.f32 %v595, 0.0
      %v622 = vmax.f32 %v600, 0.0
      %v623 = vmax.f32 %v605, 0.0
      %v624 = vld [vmem:[%s3] sm:$0xf]
      %v625 = vld [vmem:[%s3 + $0x4] sm:$0xf]
      %v626 = vld [vmem:[%s3 + $0x8] sm:$0xf]
      %v627 = vld [vmem:[%s3 + $0xc] sm:$0xf]
      %v628 = vld [vmem:[%s3 + $0x10] sm:$0xf]
      %v629 = vld [vmem:[%s3 + $0x14] sm:$0xf]
      %v630 = vld [vmem:[%s3 + $0x18] sm:$0xf]
      %v631 = vld [vmem:[%s3 + $0x1c] sm:$0xf]
      %v632 = vld [vmem:[%s3 + $0x20] sm:$0xf]
      %v633 = vld [vmem:[%s3 + $0x24] sm:$0xf]
      %v634 = vld [vmem:[%s3 + $0x28] sm:$0xf]
      %v635 = vld [vmem:[%s3 + $0x2c] sm:$0xf]
      %v636 = vld [vmem:[%s3 + $0x30] sm:$0xf]
      %v637 = vld [vmem:[%s3 + $0x34] sm:$0xf]
      %v638 = vld [vmem:[%s3 + $0x38] sm:$0xf]
      %v639 = vld [vmem:[%s3 + $0x3c] sm:$0xf]
      %v640 = vpack.c.bf16 %v609, %v608
      %v641 = vpack.c.bf16 %v611, %v610
      %v642 = vpack.c.bf16 %v613, %v612
      %v643 = vpack.c.bf16 %v615, %v614
      %v644 = vpack.c.bf16 %v617, %v616
      %v645 = vpack.c.bf16 %v619, %v618
      %v646 = vpack.c.bf16 %v621, %v620
      %v647 = vpack.c.bf16 %v623, %v622
      %v664 = vunpack.c.l.b16 %v624
      %v665 = vunpack.c.l.b16 %v625
      %v666 = vunpack.c.l.b16 %v626
      %v667 = vunpack.c.l.b16 %v627
      %v668 = vunpack.c.l.b16 %v628
      %v669 = vunpack.c.l.b16 %v629
      %v670 = vunpack.c.l.b16 %v630
      %v671 = vunpack.c.l.b16 %v631
      %v672 = vunpack.c.l.b16 %v632
      %v673 = vunpack.c.l.b16 %v633
      %v674 = vunpack.c.l.b16 %v634
      %v675 = vunpack.c.l.b16 %v635
      %v676 = vunpack.c.l.b16 %v636
      %v677 = vunpack.c.l.b16 %v637
      %v678 = vunpack.c.l.b16 %v638
      %v679 = vunpack.c.l.b16 %v639
      %v680 = vpack.c.b16 %v665, %v664
      %v681 = vpack.c.b16 %v667, %v666
      %v682 = vpack.c.b16 %v669, %v668
      %v683 = vpack.c.b16 %v671, %v670
      %v684 = vpack.c.b16 %v673, %v672
      %v685 = vpack.c.b16 %v675, %v674
      %v686 = vpack.c.b16 %v677, %v676
      %v687 = vpack.c.b16 %v679, %v678
      %696 = vmatprep.subr.bf16.mxu0 0
      %697 = vmatpush1.bf16.msra.mxu0 %v640
      %698 = vmatprep.subr.bf16.mxu0 0
      %699 = vmatpush1.bf16.msra.mxu0 %v641
      %700 = vmatprep.subr.bf16.mxu0 0
      %701 = vmatpush1.bf16.msra.mxu0 %v642
      %702 = vmatprep.subr.bf16.mxu0 0
      %703 = vmatpush1.bf16.msra.mxu0 %v643
      %704 = vmatprep.subr.bf16.mxu0 0
      %705 = vmatpush1.bf16.msra.mxu0 %v644
      %706 = vmatprep.subr.bf16.mxu0 0
      %707 = vmatpush1.bf16.msra.mxu0 %v645
      %708 = vmatprep.subr.bf16.mxu0 0
      %709 = vmatpush1.bf16.msra.mxu0 %v646
      %710 = vmatprep.subr.bf16.mxu0 0
      %711 = vmatpush1.bf16.msra.mxu0 %v647
      %712 = vmatprep.subr.bf16.mxu0 0
      %713 = vmatpush1.bf16.msra.mxu0 0
      %714 = vmatprep.subr.bf16.mxu0 0
      %715 = vmatpush1.bf16.msra.mxu0 0
      %716 = vmatprep.subr.bf16.mxu0 0
      %717 = vmatpush1.bf16.msra.mxu0 0
      %718 = vmatprep.subr.bf16.mxu0 0
      %719 = vmatpush1.bf16.msra.mxu0 0
      %720 = vmatprep.subr.bf16.mxu0 0
      %721 = vmatpush1.bf16.msra.mxu0 0
      %722 = vmatprep.subr.bf16.mxu0 0
      %723 = vmatpush1.bf16.msra.mxu0 0
      %724 = vmatprep.subr.bf16.mxu0 0
      %725 = vmatpush1.bf16.msra.mxu0 0
      %726 = vmatprep.subr.bf16.mxu0 0
      %727 = vmatpush1.bf16.msra.mxu0 0
      %728 = vmatprep.mubr.bf16.mxu0 0
      %729 = vmatmul.mubr.bf16.gmra.mrb[0].mxu0 %v680
      %v730 = vpop.f32.mrb[0].mxu0
      %v731 = vadd.f32 0.0, %v730
      %v732 = vpop.f32.mrb[0].mxu0
      %v733 = vpop.f32.mrb[0].mxu0
      %v734 = vadd.f32 0.0, %v733
      %v735 = vpop.f32.mrb[0].mxu0
      %736 = vmatprep.mubr.bf16.mxu0 0
      %737 = vmatmul.mubr.bf16.gmra.mrb[0].mxu0 %v681
      %v738 = vpop.f32.mrb[0].mxu0
      %v739 = vadd.f32 0.0, %v738
      %v740 = vpop.f32.mrb[0].mxu0
      %v741 = vpop.f32.mrb[0].mxu0
      %v742 = vadd.f32 0.0, %v741
      %v743 = vpop.f32.mrb[0].mxu0
      %744 = vmatprep.mubr.bf16.mxu0 0
      %745 = vmatmul.mubr.bf16.gmra.mrb[0].mxu0 %v682
      %v746 = vpop.f32.mrb[0].mxu0
      %v747 = vadd.f32 0.0, %v746
      %v748 = vpop.f32.mrb[0].mxu0
      %v749 = vpop.f32.mrb[0].mxu0
      %v750 = vadd.f32 0.0, %v749
      %v751 = vpop.f32.mrb[0].mxu0
      %752 = vmatprep.mubr.bf16.mxu0 0
      %753 = vmatmul.mubr.bf16.gmra.mrb[0].mxu0 %v683
      %v754 = vpop.f32.mrb[0].mxu0
      %v755 = vadd.f32 0.0, %v754
      %v756 = vpop.f32.mrb[0].mxu0
      %v757 = vpop.f32.mrb[0].mxu0
      %v758 = vadd.f32 0.0, %v757
      %v759 = vpop.f32.mrb[0].mxu0
      %760 = vmatprep.mubr.bf16.mxu0 0
      %761 = vmatmul.mubr.bf16.gmra.mrb[0].mxu0 %v684
      %v762 = vpop.f32.mrb[0].mxu0
      %v763 = vadd.f32 0.0, %v762
      %v764 = vpop.f32.mrb[0].mxu0
      %v765 = vpop.f32.mrb[0].mxu0
      %v766 = vadd.f32 0.0, %v765
      %v767 = vpop.f32.mrb[0].mxu0
      %768 = vmatprep.mubr.bf16.mxu0 0
      %769 = vmatmul.mubr.bf16.gmra.mrb[0].mxu0 %v685
      %v770 = vpop.f32.mrb[0].mxu0
      %v771 = vadd.f32 0.0, %v770
      %v772 = vpop.f32.mrb[0].mxu0
      %v773 = vpop.f32.mrb[0].mxu0
      %v774 = vadd.f32 0.0, %v773
      %v775 = vpop.f32.mrb[0].mxu0
      %776 = vmatprep.mubr.bf16.mxu0 0
      %777 = vmatmul.mubr.bf16.gmra.mrb[0].mxu0 %v686
      %v778 = vpop.f32.mrb[0].mxu0
      %v779 = vadd.f32 0.0, %v778
      %v780 = vpop.f32.mrb[0].mxu0
      %v781 = vpop.f32.mrb[0].mxu0
      %v782 = vadd.f32 0.0, %v781
      %v783 = vpop.f32.mrb[0].mxu0
      %784 = vmatprep.mubr.bf16.mxu0 0
      %785 = vmatmul.mubr.bf16.gmra.mrb[0].mxu0 %v687
      %v786 = vpop.f32.mrb[0].mxu0
      %v787 = vadd.f32 0.0, %v786
      %v788 = vpop.f32.mrb[0].mxu0
      %v789 = vpop.f32.mrb[0].mxu0
      %v790 = vadd.f32 0.0, %v789
      %v791 = vpop.f32.mrb[0].mxu0
      %792 = vdwg.mxu0
      %s793 = smul.u32 %s21, 2
      %s794 = sadd.s32 %s793, %s22
      %v795 = vlaneseq
      %v796 = vand.u32 %v795, 127
      %s797 = smul.u32 %s794, 128
      %v798 = vstv %s797
      %v799 = vadd.s32 %v798, %v796
      %vm800 = vcmp.lt.s32.totalorder %v799, 400
      %v801 = vsel %vm800, 1, 0
      %v802 = vcvt.s32.f32 %v801
      %v803 = vmul.f32 %v731, %v802
      %v804 = vmul.f32 %v734, %v802
      %v805 = vmul.f32 %v739, %v802
      %v806 = vmul.f32 %v742, %v802
      %v807 = vmul.f32 %v747, %v802
      %v808 = vmul.f32 %v750, %v802
      %v809 = vmul.f32 %v755, %v802
      %v810 = vmul.f32 %v758, %v802
      %v811 = vmul.f32 %v763, %v802
      %v812 = vmul.f32 %v766, %v802
      %v813 = vmul.f32 %v771, %v802
      %v814 = vmul.f32 %v774, %v802
      %v815 = vmul.f32 %v779, %v802
      %v816 = vmul.f32 %v782, %v802
      %v817 = vmul.f32 %v787, %v802
      %v818 = vmul.f32 %v790, %v802
      %v819 = vld [vmem:[%s255] sm:$0xff]
      %v820 = vld [vmem:[%s255 + $0x8] sm:$0xff]
      %v821 = vld [vmem:[%s255 + $0x10] sm:$0xff]
      %v822 = vld [vmem:[%s255 + $0x18] sm:$0xff]
      %v823 = vld [vmem:[%s255 + $0x20] sm:$0xff]
      %v824 = vld [vmem:[%s255 + $0x28] sm:$0xff]
      %v825 = vld [vmem:[%s255 + $0x30] sm:$0xff]
      %v826 = vld [vmem:[%s255 + $0x38] sm:$0xff]
      %v827 = vld [vmem:[%s255 + $0x40] sm:$0xff]
      %v828 = vld [vmem:[%s255 + $0x48] sm:$0xff]
      %v829 = vld [vmem:[%s255 + $0x50] sm:$0xff]
      %v830 = vld [vmem:[%s255 + $0x58] sm:$0xff]
      %v831 = vld [vmem:[%s255 + $0x60] sm:$0xff]
      %v832 = vld [vmem:[%s255 + $0x68] sm:$0xff]
      %v833 = vld [vmem:[%s255 + $0x70] sm:$0xff]
      %v834 = vld [vmem:[%s255 + $0x78] sm:$0xff]
      %835 = vadd.xlane.f32.xlu0 %v803
      %v836 = vpop.xlane.xlu0 %835
      %837 = vadd.xlane.f32.xlu0 %v804
      %v838 = vpop.xlane.xlu0 %837
      %839 = vadd.xlane.f32.xlu0 %v805
      %v840 = vpop.xlane.xlu0 %839
      %841 = vadd.xlane.f32.xlu0 %v806
      %v842 = vpop.xlane.xlu0 %841
      %843 = vadd.xlane.f32.xlu0 %v807
      %v844 = vpop.xlane.xlu0 %843
      %845 = vadd.xlane.f32.xlu0 %v808
      %v846 = vpop.xlane.xlu0 %845
      %847 = vadd.xlane.f32.xlu0 %v809
      %v848 = vpop.xlane.xlu0 %847
      %849 = vadd.xlane.f32.xlu0 %v810
      %v850 = vpop.xlane.xlu0 %849
      %851 = vadd.xlane.f32.xlu0 %v811
      %v852 = vpop.xlane.xlu0 %851
      %853 = vadd.xlane.f32.xlu0 %v812
      %v854 = vpop.xlane.xlu0 %853
      %855 = vadd.xlane.f32.xlu0 %v813
      %v856 = vpop.xlane.xlu0 %855
      %857 = vadd.xlane.f32.xlu0 %v814
      %v858 = vpop.xlane.xlu0 %857
      %859 = vadd.xlane.f32.xlu0 %v815
      %v860 = vpop.xlane.xlu0 %859
      %861 = vadd.xlane.f32.xlu0 %v816
      %v862 = vpop.xlane.xlu0 %861
      %863 = vadd.xlane.f32.xlu0 %v817
      %v864 = vpop.xlane.xlu0 %863
      %865 = vadd.xlane.f32.xlu0 %v818
      %v866 = vpop.xlane.xlu0 %865
      %v867 = vadd.f32 %v819, %v836
      %v868 = vadd.f32 %v820, %v838
      %v869 = vadd.f32 %v821, %v840
      %v870 = vadd.f32 %v822, %v842
      %v871 = vadd.f32 %v823, %v844
      %v872 = vadd.f32 %v824, %v846
      %v873 = vadd.f32 %v825, %v848
      %v874 = vadd.f32 %v826, %v850
      %v875 = vadd.f32 %v827, %v852
      %v876 = vadd.f32 %v828, %v854
      %v877 = vadd.f32 %v829, %v856
      %v878 = vadd.f32 %v830, %v858
      %v879 = vadd.f32 %v831, %v860
      %v880 = vadd.f32 %v832, %v862
      %v881 = vadd.f32 %v833, %v864
      %v882 = vadd.f32 %v834, %v866
      %vm883 = vcmask 7168
      %884 = vst.msk [vmem:[%s255] sm:$0xff] %vm883, %v867
      %885 = vst.msk [vmem:[%s255 + $0x8] sm:$0xff] %vm883, %v868
      %886 = vst.msk [vmem:[%s255 + $0x10] sm:$0xff] %vm883, %v869
      %887 = vst.msk [vmem:[%s255 + $0x18] sm:$0xff] %vm883, %v870
      %888 = vst.msk [vmem:[%s255 + $0x20] sm:$0xff] %vm883, %v871
      %889 = vst.msk [vmem:[%s255 + $0x28] sm:$0xff] %vm883, %v872
      %890 = vst.msk [vmem:[%s255 + $0x30] sm:$0xff] %vm883, %v873
      %891 = vst.msk [vmem:[%s255 + $0x38] sm:$0xff] %vm883, %v874
      %892 = vst.msk [vmem:[%s255 + $0x40] sm:$0xff] %vm883, %v875
      %893 = vst.msk [vmem:[%s255 + $0x48] sm:$0xff] %vm883, %v876
      %894 = vst.msk [vmem:[%s255 + $0x50] sm:$0xff] %vm883, %v877
      %895 = vst.msk [vmem:[%s255 + $0x58] sm:$0xff] %vm883, %v878
      %896 = vst.msk [vmem:[%s255 + $0x60] sm:$0xff] %vm883, %v879
      %897 = vst.msk [vmem:[%s255 + $0x68] sm:$0xff] %vm883, %v880
      %898 = vst.msk [vmem:[%s255 + $0x70] sm:$0xff] %vm883, %v881
      %899 = vst.msk [vmem:[%s255 + $0x78] sm:$0xff] %vm883, %v882
      %v900 = vld [vmem:[%s261] sm:$0xff]
      %v901 = vld [vmem:[%s261 + $0x8] sm:$0xff]
      %v902 = vld [vmem:[%s261 + $0x10] sm:$0xff]
      %v903 = vld [vmem:[%s261 + $0x18] sm:$0xff]
      %v904 = vld [vmem:[%s261 + $0x20] sm:$0xff]
      %v905 = vld [vmem:[%s261 + $0x28] sm:$0xff]
      %v906 = vld [vmem:[%s261 + $0x30] sm:$0xff]
      %v907 = vld [vmem:[%s261 + $0x38] sm:$0xff]
      %v908 = vld [vmem:[%s261 + $0x40] sm:$0xff]
      %v909 = vld [vmem:[%s261 + $0x48] sm:$0xff]
      %v910 = vld [vmem:[%s261 + $0x50] sm:$0xff]
      %v911 = vld [vmem:[%s261 + $0x58] sm:$0xff]
      %v912 = vld [vmem:[%s261 + $0x60] sm:$0xff]
      %v913 = vld [vmem:[%s261 + $0x68] sm:$0xff]
      %v914 = vld [vmem:[%s261 + $0x70] sm:$0xff]
      %v915 = vld [vmem:[%s261 + $0x78] sm:$0xff]
      %v916 = vmul.f32 %v803, %v803
      %v917 = vmul.f32 %v804, %v804
      %v918 = vmul.f32 %v805, %v805
      %v919 = vmul.f32 %v806, %v806
      %v920 = vmul.f32 %v807, %v807
      %v921 = vmul.f32 %v808, %v808
      %v922 = vmul.f32 %v809, %v809
      %v923 = vmul.f32 %v810, %v810
      %v924 = vmul.f32 %v811, %v811
      %v925 = vmul.f32 %v812, %v812
      %v926 = vmul.f32 %v813, %v813
      %v927 = vmul.f32 %v814, %v814
      %v928 = vmul.f32 %v815, %v815
      %v929 = vmul.f32 %v816, %v816
      %v930 = vmul.f32 %v817, %v817
      %v931 = vmul.f32 %v818, %v818
      %932 = vadd.xlane.f32.xlu0 %v916
      %v933 = vpop.xlane.xlu0 %932
      %934 = vadd.xlane.f32.xlu0 %v917
      %v935 = vpop.xlane.xlu0 %934
      %936 = vadd.xlane.f32.xlu0 %v918
      %v937 = vpop.xlane.xlu0 %936
      %938 = vadd.xlane.f32.xlu0 %v919
      %v939 = vpop.xlane.xlu0 %938
      %940 = vadd.xlane.f32.xlu0 %v920
      %v941 = vpop.xlane.xlu0 %940
      %942 = vadd.xlane.f32.xlu0 %v921
      %v943 = vpop.xlane.xlu0 %942
      %944 = vadd.xlane.f32.xlu0 %v922
      %v945 = vpop.xlane.xlu0 %944
      %946 = vadd.xlane.f32.xlu0 %v923
      %v947 = vpop.xlane.xlu0 %946
      %948 = vadd.xlane.f32.xlu0 %v924
      %v949 = vpop.xlane.xlu0 %948
      %950 = vadd.xlane.f32.xlu0 %v925
      %v951 = vpop.xlane.xlu0 %950
      %952 = vadd.xlane.f32.xlu0 %v926
      %v953 = vpop.xlane.xlu0 %952
      %954 = vadd.xlane.f32.xlu0 %v927
      %v955 = vpop.xlane.xlu0 %954
      %956 = vadd.xlane.f32.xlu0 %v928
      %v957 = vpop.xlane.xlu0 %956
      %958 = vadd.xlane.f32.xlu0 %v929
      %v959 = vpop.xlane.xlu0 %958
      %960 = vadd.xlane.f32.xlu0 %v930
      %v961 = vpop.xlane.xlu0 %960
      %962 = vadd.xlane.f32.xlu0 %v931
      %v963 = vpop.xlane.xlu0 %962
      %v964 = vadd.f32 %v900, %v933
      %v965 = vadd.f32 %v901, %v935
      %v966 = vadd.f32 %v902, %v937
      %v967 = vadd.f32 %v903, %v939
      %v968 = vadd.f32 %v904, %v941
      %v969 = vadd.f32 %v905, %v943
      %v970 = vadd.f32 %v906, %v945
      %v971 = vadd.f32 %v907, %v947
      %v972 = vadd.f32 %v908, %v949
      %v973 = vadd.f32 %v909, %v951
      %v974 = vadd.f32 %v910, %v953
      %v975 = vadd.f32 %v911, %v955
      %v976 = vadd.f32 %v912, %v957
      %v977 = vadd.f32 %v913, %v959
      %v978 = vadd.f32 %v914, %v961
      %v979 = vadd.f32 %v915, %v963
      %980 = vst.msk [vmem:[%s261] sm:$0xff] %vm883, %v964
      %981 = vst.msk [vmem:[%s261 + $0x8] sm:$0xff] %vm883, %v965
      %982 = vst.msk [vmem:[%s261 + $0x10] sm:$0xff] %vm883, %v966
      %983 = vst.msk [vmem:[%s261 + $0x18] sm:$0xff] %vm883, %v967
      %984 = vst.msk [vmem:[%s261 + $0x20] sm:$0xff] %vm883, %v968
      %985 = vst.msk [vmem:[%s261 + $0x28] sm:$0xff] %vm883, %v969
      %986 = vst.msk [vmem:[%s261 + $0x30] sm:$0xff] %vm883, %v970
      %987 = vst.msk [vmem:[%s261 + $0x38] sm:$0xff] %vm883, %v971
      %988 = vst.msk [vmem:[%s261 + $0x40] sm:$0xff] %vm883, %v972
      %989 = vst.msk [vmem:[%s261 + $0x48] sm:$0xff] %vm883, %v973
      %990 = vst.msk [vmem:[%s261 + $0x50] sm:$0xff] %vm883, %v974
      %991 = vst.msk [vmem:[%s261 + $0x58] sm:$0xff] %vm883, %v975
      %992 = vst.msk [vmem:[%s261 + $0x60] sm:$0xff] %vm883, %v976
      %993 = vst.msk [vmem:[%s261 + $0x68] sm:$0xff] %vm883, %v977
      %994 = vst.msk [vmem:[%s261 + $0x70] sm:$0xff] %vm883, %v978
      %995 = vst.msk [vmem:[%s261 + $0x78] sm:$0xff] %vm883, %v979
      %s996 = smul.u32 16, %s21
      %p997 = scmp.lt.s32.totalorder %s996, 31
      %s998 = scalar_select %p997, %s996, 31
      %s999 = smul.addr %s998, 8
      %s1000 = scalar_lea.vmem %s4, %s999
      %s1001 = smul.u32 16, %s21
      %p1002 = scmp.lt.s32.totalorder %s1001, 31
      %s1003 = scalar_select %p1002, %s1001, 31
      %s1004 = smul.addr %s1003, 8
      %s1005 = scalar_lea.vmem %s5, %s1004
      // Predicated region
      $region41: #{patch_deformation_mlp.2} parent=35 // pred_check
        %p1006 = pneg %p140
      $region42: #{patch_deformation_mlp.2} parent=35 // pred_check_branch
        %1008 = sbr.rel (%p1006) target = $region44
      $region43: #{patch_deformation_mlp.2} parent=35 // pred_region
        %s1009 = smul.u32 16, %s21
      $region44: #{patch_deformation_mlp.2} parent=35 // pred_fallthru
        _
      // Predicated region
      $region45: #{patch_deformation_mlp.2} parent=35 // pred_check
        %p1010 = pneg %p166
      $region46: #{patch_deformation_mlp.2} parent=35 // pred_check_branch
        %1012 = sbr.rel (%p1010) target = $region48
      $region47: #{patch_deformation_mlp.2} parent=35 // pred_region
        %s1013 = smul.u32 16, %s21
      $region48: #{patch_deformation_mlp.2} parent=35 // pred_fallthru
        _
    $region36: #{patch_deformation_mlp.2} parent=5 // pred_fallthru
      _
    %p1014 = scmp.le.s32.totalorder 2, %s12
    // Predicated region
    $region49: #{patch_deformation_mlp.2} parent=5 // pred_check
      %p1015 = pneg %p1014
    $region50: #{patch_deformation_mlp.2} parent=5 // pred_check_branch
      %1017 = sbr.rel (%p1015) target = $region52
    $region51: #{patch_deformation_mlp.2} parent=5 // pred_region
      %s1018 = ssub.s32 %s12, 2
      // Predicated region
      $region53: #{patch_deformation_mlp.2} parent=51 // pred_check
        %p1019 = pneg %p146
      $region54: #{patch_deformation_mlp.2} parent=51 // pred_check_branch
        %1021 = sbr.rel (%p1019) target = $region56
      $region55: #{patch_deformation_mlp.2} parent=51 // pred_region
        %s1022 = smul.u32 16, %s23
        %p1023 = scmp.lt.s32.totalorder %s1022, 31
        %s1024 = scalar_select %p1023, %s1022, 31
        %s1025 = smul.addr %s1024, 8
        %s1026 = scalar_lea.vmem %s4, %s1025
      $region56: #{patch_deformation_mlp.2} parent=51 // pred_fallthru
        _
      // Predicated region
      $region57: #{patch_deformation_mlp.2} parent=51 // pred_check
        %p1027 = pneg %p172
      $region58: #{patch_deformation_mlp.2} parent=51 // pred_check_branch
        %1029 = sbr.rel (%p1027) target = $region60
      $region59: #{patch_deformation_mlp.2} parent=51 // pred_region
        %s1030 = smul.u32 16, %s23
        %p1031 = scmp.lt.s32.totalorder %s1030, 31
        %s1032 = scalar_select %p1031, %s1030, 31
        %s1033 = smul.addr %s1032, 8
        %s1034 = scalar_lea.vmem %s5, %s1033
      $region60: #{patch_deformation_mlp.2} parent=51 // pred_fallthru
        _
    $region52: #{patch_deformation_mlp.2} parent=5 // pred_fallthru
      _
  $region6: #{patch_deformation_mlp.2} parent=0 // loop_footer
    %s16 = sadd.s32 1, %s12
  $region7: #{patch_deformation_mlp.2} parent=0 // loop_footer_branch
    %11 = sbr.rel target = $region3
  $region8: #{patch_deformation_mlp.2} parent=0 // loop_exit
    _

</llo_original>
